<compile_context>
chip_gen: v5e
topology: v5e:2x2
jax: 0.10.0
libtpu: 0.0.40
codegen_flags: <defaults>
</compile_context>

<pallas_src>
import math

import jax
import jax.numpy as jnp
from jax.experimental import pallas as pl
from jax.experimental.pallas import tpu as pltpu


def _round_up(v, m):
    return (v + m - 1) // m * m


# ---------------------------------------------------------------------------
# Pallas kernel: one fused matmul per batch element
#   out = [relu]( LHS @ W + bias [+ residual] )
# ---------------------------------------------------------------------------
def _make_conv_mm_kernel(apply_relu, has_residual):
    def kernel(lhs_ref, w_ref, b_ref, *rest):
        if has_residual:
            res_ref, o_ref = rest
        else:
            (o_ref,) = rest
        acc = jnp.dot(lhs_ref[0], w_ref[...],
                      preferred_element_type=jnp.float32)
        acc = acc + b_ref[...]
        if has_residual:
            acc = acc + res_ref[0].astype(jnp.float32)
        if apply_relu:
            acc = jnp.maximum(acc, 0.0)
        o_ref[0] = acc.astype(o_ref.dtype)

    return kernel


def conv3d_pallas(x, w, b, *, stride, ksize, residual=None, apply_relu=False):
    """3D convolution (padding = 1 for k=3, 0 for k=1) with fused epilogue.

    x        : (N, D, H, W, cin) channels-last (any float dtype; cast to bf16)
    w        : (k, k, k, cin, cout) f32
    b        : (cout,) f32
    residual : optional (N, Do, Ho, Wo, cout), fused add before the ReLU
    returns  : (N, Do, Ho, Wo, cout) bf16
    """
    N, D, H, W, cin = x.shape
    k, s = ksize, stride
    pad = 1 if k == 3 else 0
    cout = w.shape[-1]
    assert w.shape == (k, k, k, cin, cout)

    Do = (D + 2 * pad - k) // s + 1
    Ho = (H + 2 * pad - k) // s + 1
    Wo = (W + 2 * pad - k) // s + 1
    M = Do * Ho * Wo
    M_pad = _round_up(M, 8)
    K = k * k * k * cin
    K_pad = _round_up(K, 128)
    cout_p = _round_up(cout, 128)

    xb = x.astype(jnp.bfloat16)
    if pad:
        xb = jnp.pad(xb, ((0, 0), (pad, pad), (pad, pad), (pad, pad), (0, 0)))

    # Fold the k^3 taps (x cin) into the contraction dimension with static
    # strided slices; stride-2 convs only materialize the strided outputs.
    cols = []
    for kd in range(k):
        for kh in range(k):
            for kw in range(k):
                cols.append(xb[:, kd:kd + s * (Do - 1) + 1:s,
                               kh:kh + s * (Ho - 1) + 1:s,
                               kw:kw + s * (Wo - 1) + 1:s, :])
    lhs = jnp.concatenate(cols, axis=-1) if len(cols) > 1 else cols[0]
    lhs = lhs.reshape(N, M, K)
    lhs = jnp.pad(lhs, ((0, 0), (0, M_pad - M), (0, K_pad - K)))

    # Weight rows are ((kd*k + kh)*k + kw)*cin + c -> matches the LHS columns.
    w_p = jnp.pad(w.reshape(K, cout).astype(jnp.bfloat16),
                  ((0, K_pad - K), (0, cout_p - cout)))
    b_p = jnp.pad(b, (0, cout_p - cout)).reshape(1, cout_p).astype(jnp.float32)

    args = [lhs, w_p, b_p]
    in_specs = [
        pl.BlockSpec((1, M_pad, K_pad), lambda n: (n, 0, 0)),
        pl.BlockSpec((K_pad, cout_p), lambda n: (0, 0)),
        pl.BlockSpec((1, cout_p), lambda n: (0, 0)),
    ]

    has_res = residual is not None
    if has_res:
        assert residual.shape[:4] == (N, Do, Ho, Wo)
        r = residual.astype(jnp.bfloat16)
        r = jnp.pad(r, ((0, 0), (0, 0), (0, 0), (0, 0),
                        (0, cout_p - r.shape[-1])))
        r = r.reshape(N, M, cout_p)
        r = jnp.pad(r, ((0, 0), (0, M_pad - M), (0, 0)))
        args.append(r)
        in_specs.append(pl.BlockSpec((1, M_pad, cout_p), lambda n: (n, 0, 0)))

    kernel = _make_conv_mm_kernel(apply_relu, has_res)
    out = pl.pallas_call(
        kernel,
        out_shape=jax.ShapeDtypeStruct((N, M_pad, cout_p), jnp.bfloat16),
        grid_spec=pltpu.PrefetchScalarGridSpec(
            num_scalar_prefetch=0,
            grid=(N,),
            in_specs=in_specs,
            out_specs=pl.BlockSpec((1, M_pad, cout_p), lambda n: (n, 0, 0)),
        ),
        compiler_params=pltpu.CompilerParams(
            dimension_semantics=("parallel",),
        ),
    )(*args)

    out = out[:, :M, :cout].reshape(N, Do, Ho, Wo, cout)
    return out


# ---------------------------------------------------------------------------
# Parameter initialization (deterministic, PyTorch-like uniform fan-in bound)
# ---------------------------------------------------------------------------
def _init_conv(key, k, cin, cout):
    kw_, kb = jax.random.split(key)
    bound = 1.0 / math.sqrt(cin * k ** 3)
    w = jax.random.uniform(kw_, (k, k, k, cin, cout), jnp.float32, -bound, bound)
    b = jax.random.uniform(kb, (cout,), jnp.float32, -bound, bound)
    return w, b


def init_basic_block(key, inplane, outplane, downsample):
    keys = jax.random.split(key, 3)
    params = {"downsample": downsample}
    if downsample:
        params["skip_k"] = 3
        params["skip_w"], params["skip_b"] = _init_conv(keys[0], 3, inplane, outplane)
    elif inplane == outplane:
        params["skip_w"] = None
    else:
        params["skip_k"] = 1
        params["skip_w"], params["skip_b"] = _init_conv(keys[0], 1, inplane, outplane)
    params["w1"], params["b1"] = _init_conv(keys[1], 3, inplane, outplane)
    params["w2"], params["b2"] = _init_conv(keys[2], 3, outplane, outplane)
    return params


def init_res_block(key, inplane, outplane, num_layers, down_sample=True):
    keys = jax.random.split(key, num_layers)
    blocks = [init_basic_block(keys[0], inplane, outplane, down_sample)]
    for i in range(1, num_layers):
        blocks.append(init_basic_block(keys[i], outplane, outplane, False))
    return blocks


# ---------------------------------------------------------------------------
# Forward passes (mirror the PyTorch modules); activations stay bf16 between
# convs, each conv accumulates in f32 on the MXU.
# ---------------------------------------------------------------------------
def basic_block_forward(x, params):
    stride = 2 if params["downsample"] else 1
    if params.get("skip_w") is not None:
        skip = conv3d_pallas(x, params["skip_w"], params["skip_b"],
                             stride=stride, ksize=params["skip_k"])
    else:
        skip = x
    h = conv3d_pallas(x, params["w1"], params["b1"],
                      stride=stride, ksize=3, apply_relu=True)
    out = conv3d_pallas(h, params["w2"], params["b2"],
                        stride=1, ksize=3, residual=skip, apply_relu=True)
    return out


def res_block_forward(x, blocks):
    x = x.astype(jnp.bfloat16)
    for p in blocks:
        x = basic_block_forward(x, p)
    return x.astype(jnp.float32)


# ---------------------------------------------------------------------------
# f32 XLA reference (for a loose-tolerance sanity check only)
# ---------------------------------------------------------------------------
def _conv3d_ref(x, w, b, *, stride, ksize):
    pad = 1 if ksize == 3 else 0
    out = jax.lax.conv_general_dilated(
        x, w, window_strides=(stride, stride, stride),
        padding=[(pad, pad)] * 3,
        dimension_numbers=("NDHWC", "DHWIO", "NDHWC"))
    return out + b


def basic_block_ref(x, params):
    stride = 2 if params["downsample"] else 1
    if params.get("skip_w") is not None:
        skip = _conv3d_ref(x, params["skip_w"], params["skip_b"],
                           stride=stride, ksize=params["skip_k"])
    else:
        skip = x
    h = jax.nn.relu(_conv3d_ref(x, params["w1"], params["b1"],
                                stride=stride, ksize=3))
    return jax.nn.relu(_conv3d_ref(h, params["w2"], params["b2"],
                                   stride=1, ksize=3) + skip)


def res_block_ref(x, blocks):
    for p in blocks:
        x = basic_block_ref(x, p)
    return x


# ---------------------------------------------------------------------------
if __name__ == "__main__":
    key = jax.random.PRNGKey(0)
    kx, kp = jax.random.split(key)

    # ResBlock(inplane=4, outplane=8, num_layers=2, down_sample=True)
    # on a (2, 4, 8, 8, 8) NCDHW input.
    inplane, outplane, num_layers = 4, 8, 2
    x_ncdhw = jax.random.normal(kx, (2, inplane, 8, 8, 8), dtype=jnp.float32)
    x = jnp.transpose(x_ncdhw, (0, 2, 3, 4, 1))          # NDHWC

    blocks = init_res_block(kp, inplane, outplane, num_layers, down_sample=True)

    fwd = jax.jit(lambda xx: res_block_forward(xx, blocks))
    y = fwd(x)                                           # (2, 4, 4, 4, 8) NDHWC
    jax.block_until_ready(y)

    # Loose-tolerance check against an f32 XLA reference (activations are
    # bf16 between convs, so exact match is not expected).
    y_ref = jax.jit(lambda xx: res_block_ref(xx, blocks))(x)
    err = float(jnp.max(jnp.abs(y - y_ref)))
    scale = float(jnp.max(jnp.abs(y_ref)))

    y_ncdhw = jnp.transpose(y, (0, 4, 1, 2, 3))          # NCDHW (2, 8, 4, 4, 4)
    assert y_ncdhw.shape == (2, outplane, 4, 4, 4)
    assert err <= 0.1 * scale + 0.1, f"mismatch: err={err}, scale={scale}"
    print("KERNEL_OK")
</pallas_src>

<mosaic_0001>
module attributes {stable_mosaic.version = 11 : i64} {
  func.func @kernel(%arg0: i32, %arg1: memref<1x64x128xbf16, #tpu.memory_space<vmem>>, %arg2: memref<128x128xbf16, #tpu.memory_space<vmem>>, %arg3: memref<1x128xf32, #tpu.memory_space<vmem>>, %arg4: memref<1x64x128xbf16, #tpu.memory_space<vmem>>) attributes {dimension_semantics = [#tpu.dimension_semantics<parallel>], iteration_bounds = array<i64: 2>, scalar_prefetch = 0 : i64, scratch_operands = 0 : i64, tpu.core_type = #tpu.core_type<tc>, window_params = [{transform_indices = @transform_0, window_bounds = array<i64: 1, 64, 128>}, {pipeline_mode = #tpu.pipeline_mode<synchronous>, transform_indices = @transform_1, window_bounds = array<i64: 128, 128>}, {pipeline_mode = #tpu.pipeline_mode<synchronous>, transform_indices = @transform_2, window_bounds = array<i64: 1, 128>}, {transform_indices = @transform_3, window_bounds = array<i64: 1, 64, 128>}]} {
    %c0 = arith.constant 0 : index
    %c0_0 = arith.constant 0 : index
    %c0_1 = arith.constant 0 : index
    %0 = vector.load %arg1[%c0, %c0_0, %c0_1] : memref<1x64x128xbf16, #tpu.memory_space<vmem>>, vector<1x64x128xbf16>
    %1 = vector.shape_cast %0 : vector<1x64x128xbf16> to vector<64x128xbf16>
    %c0_2 = arith.constant 0 : index
    %c0_3 = arith.constant 0 : index
    %2 = vector.load %arg2[%c0_2, %c0_3] : memref<128x128xbf16, #tpu.memory_space<vmem>>, vector<128x128xbf16>
    %cst = arith.constant dense<0.000000e+00> : vector<64x128xf32>
    %3 = tpu.matmul %1, %2, %cst {dimension_numbers = #tpu.dot_dimension_numbers<[1], [0], [0], [1], [0, 0, 1, 1], [], []>} : vector<64x128xbf16>, vector<128x128xbf16>, vector<64x128xf32> -> vector<64x128xf32>
    %c0_4 = arith.constant 0 : index
    %c0_5 = arith.constant 0 : index
    %4 = vector.load %arg3[%c0_4, %c0_5] : memref<1x128xf32, #tpu.memory_space<vmem>>, vector<1x128xf32>
    %5 = vector.broadcast %4 : vector<1x128xf32> to vector<64x128xf32>
    %6 = arith.addf %3, %5 : vector<64x128xf32>
    %cst_6 = arith.constant 0.000000e+00 : f32
    %7 = vector.broadcast %cst_6 : f32 to vector<64x128xf32>
    %8 = arith.maximumf %6, %7 : vector<64x128xf32>
    %9 = arith.truncf %8 : vector<64x128xf32> to vector<64x128xbf16>
    %c0_7 = arith.constant 0 : index
    %c0_8 = arith.constant 0 : index
    %c0_9 = arith.constant 0 : index
    %10 = vector.load %arg4[%c0_7, %c0_8, %c0_9] : memref<1x64x128xbf16, #tpu.memory_space<vmem>>, vector<1x64x128xbf16>
    %11 = vector.shape_cast %10 : vector<1x64x128xbf16> to vector<64x128xbf16>
    %12 = vector.shape_cast %9 : vector<64x128xbf16> to vector<1x64x128xbf16>
    tpu.vector_store %arg4[%c0_7, %c0_8, %c0_9], %12 {strides = array<i32>} : memref<1x64x128xbf16, #tpu.memory_space<vmem>>, vector<1x64x128xbf16>,
    return
  }
  func.func @transform_0(%arg0: i32) -> (i32, i32, i32) {
    %c0_i32 = arith.constant 0 : i32
    %c0_i32_0 = arith.constant 0 : i32
    %c0_i32_1 = arith.constant 0 : i32
    return %arg0, %c0_i32, %c0_i32_0 : i32, i32, i32
  }
  func.func @transform_1(%arg0: i32) -> (i32, i32) {
    %c0_i32 = arith.constant 0 : i32
    %c0_i32_0 = arith.constant 0 : i32
    %c0_i32_1 = arith.constant 0 : i32
    return %c0_i32, %c0_i32_0 : i32, i32
  }
  func.func @transform_2(%arg0: i32) -> (i32, i32) {
    %c0_i32 = arith.constant 0 : i32
    %c0_i32_0 = arith.constant 0 : i32
    %c0_i32_1 = arith.constant 0 : i32
    return %c0_i32, %c0_i32_0 : i32, i32
  }
  func.func @transform_3(%arg0: i32) -> (i32, i32, i32) {
    %c0_i32 = arith.constant 0 : i32
    %c0_i32_0 = arith.constant 0 : i32
    %c0_i32_1 = arith.constant 0 : i32
    return %arg0, %c0_i32, %c0_i32_0 : i32, i32, i32
  }
}

module attributes {stable_mosaic.version = 11 : i64} {
  func.func @kernel(%arg0: i32, %arg1: memref<1x64x128xbf16, #tpu.memory_space<vmem>>, %arg2: memref<128x128xbf16, #tpu.memory_space<vmem>>, %arg3: memref<1x128xf32, #tpu.memory_space<vmem>>, %arg4: memref<1x64x128xbf16, #tpu.memory_space<vmem>>) attributes {dimension_semantics = [#tpu.dimension_semantics<parallel>], iteration_bounds = array<i64: 2>, scalar_prefetch = 0 : i64, scratch_operands = 0 : i64, tpu.core_type = #tpu.core_type<tc>, window_params = [{transform_indices = @transform_0, window_bounds = array<i64: 1, 64, 128>}, {pipeline_mode = #tpu.pipeline_mode<synchronous>, transform_indices = @transform_1, window_bounds = array<i64: 128, 128>}, {pipeline_mode = #tpu.pipeline_mode<synchronous>, transform_indices = @transform_2, window_bounds = array<i64: 1, 128>}, {transform_indices = @transform_3, window_bounds = array<i64: 1, 64, 128>}]} {
    %c0 = arith.constant 0 : index
    %c0_0 = arith.constant 0 : index
    %c0_1 = arith.constant 0 : index
    %0 = vector.load %arg1[%c0, %c0_0, %c0_1] : memref<1x64x128xbf16, #tpu.memory_space<vmem>>, vector<1x64x128xbf16>
    %1 = vector.shape_cast %0 : vector<1x64x128xbf16> to vector<64x128xbf16>
    %c0_2 = arith.constant 0 : index
    %c0_3 = arith.constant 0 : index
    %2 = vector.load %arg2[%c0_2, %c0_3] : memref<128x128xbf16, #tpu.memory_space<vmem>>, vector<128x128xbf16>
    %cst = arith.constant dense<0.000000e+00> : vector<64x128xf32>
    %3 = tpu.matmul %1, %2, %cst {dimension_numbers = #tpu.dot_dimension_numbers<[1], [0], [0], [1], [0, 0, 1, 1], [], []>} : vector<64x128xbf16>, vector<128x128xbf16>, vector<64x128xf32> -> vector<64x128xf32>
    %c0_4 = arith.constant 0 : index
    %c0_5 = arith.constant 0 : index
    %4 = vector.load %arg3[%c0_4, %c0_5] : memref<1x128xf32, #tpu.memory_space<vmem>>, vector<1x128xf32>
    %5 = vector.broadcast %4 : vector<1x128xf32> to vector<64x128xf32>
    %6 = arith.addf %3, %5 : vector<64x128xf32>
    %7 = arith.truncf %6 : vector<64x128xf32> to vector<64x128xbf16>
    %c0_6 = arith.constant 0 : index
    %c0_7 = arith.constant 0 : index
    %c0_8 = arith.constant 0 : index
    %8 = vector.load %arg4[%c0_6, %c0_7, %c0_8] : memref<1x64x128xbf16, #tpu.memory_space<vmem>>, vector<1x64x128xbf16>
    %9 = vector.shape_cast %8 : vector<1x64x128xbf16> to vector<64x128xbf16>
    %10 = vector.shape_cast %7 : vector<64x128xbf16> to vector<1x64x128xbf16>
    tpu.vector_store %arg4[%c0_6, %c0_7, %c0_8], %10 {strides = array<i32>} : memref<1x64x128xbf16, #tpu.memory_space<vmem>>, vector<1x64x128xbf16>,
    return
  }
  func.func @transform_0(%arg0: i32) -> (i32, i32, i32) {
    %c0_i32 = arith.constant 0 : i32
    %c0_i32_0 = arith.constant 0 : i32
    %c0_i32_1 = arith.constant 0 : i32
    return %arg0, %c0_i32, %c0_i32_0 : i32, i32, i32
  }
  func.func @transform_1(%arg0: i32) -> (i32, i32) {
    %c0_i32 = arith.constant 0 : i32
    %c0_i32_0 = arith.constant 0 : i32
    %c0_i32_1 = arith.constant 0 : i32
    return %c0_i32, %c0_i32_0 : i32, i32
  }
  func.func @transform_2(%arg0: i32) -> (i32, i32) {
    %c0_i32 = arith.constant 0 : i32
    %c0_i32_0 = arith.constant 0 : i32
    %c0_i32_1 = arith.constant 0 : i32
    return %c0_i32, %c0_i32_0 : i32, i32
  }
  func.func @transform_3(%arg0: i32) -> (i32, i32, i32) {
    %c0_i32 = arith.constant 0 : i32
    %c0_i32_0 = arith.constant 0 : i32
    %c0_i32_1 = arith.constant 0 : i32
    return %arg0, %c0_i32, %c0_i32_0 : i32, i32, i32
  }
}

module attributes {stable_mosaic.version = 11 : i64} {
  func.func @kernel(%arg0: i32, %arg1: memref<1x64x256xbf16, #tpu.memory_space<vmem>>, %arg2: memref<256x128xbf16, #tpu.memory_space<vmem>>, %arg3: memref<1x128xf32, #tpu.memory_space<vmem>>, %arg4: memref<1x64x128xbf16, #tpu.memory_space<vmem>>, %arg5: memref<1x64x128xbf16, #tpu.memory_space<vmem>>) attributes {dimension_semantics = [#tpu.dimension_semantics<parallel>], iteration_bounds = array<i64: 2>, scalar_prefetch = 0 : i64, scratch_operands = 0 : i64, tpu.core_type = #tpu.core_type<tc>, window_params = [{transform_indices = @transform_0, window_bounds = array<i64: 1, 64, 256>}, {pipeline_mode = #tpu.pipeline_mode<synchronous>, transform_indices = @transform_1, window_bounds = array<i64: 256, 128>}, {pipeline_mode = #tpu.pipeline_mode<synchronous>, transform_indices = @transform_2, window_bounds = array<i64: 1, 128>}, {transform_indices = @transform_3, window_bounds = array<i64: 1, 64, 128>}, {transform_indices = @transform_4, window_bounds = array<i64: 1, 64, 128>}]} {
    %c0 = arith.constant 0 : index
    %c0_0 = arith.constant 0 : index
    %c0_1 = arith.constant 0 : index
    %0 = vector.load %arg1[%c0, %c0_0, %c0_1] : memref<1x64x256xbf16, #tpu.memory_space<vmem>>, vector<1x64x256xbf16>
    %1 = vector.shape_cast %0 : vector<1x64x256xbf16> to vector<64x256xbf16>
    %c0_2 = arith.constant 0 : index
    %c0_3 = arith.constant 0 : index
    %2 = vector.load %arg2[%c0_2, %c0_3] : memref<256x128xbf16, #tpu.memory_space<vmem>>, vector<256x128xbf16>
    %cst = arith.constant dense<0.000000e+00> : vector<64x128xf32>
    %3 = tpu.matmul %1, %2, %cst {dimension_numbers = #tpu.dot_dimension_numbers<[1], [0], [0], [1], [0, 0, 1, 1], [], []>} : vector<64x256xbf16>, vector<256x128xbf16>, vector<64x128xf32> -> vector<64x128xf32>
    %c0_4 = arith.constant 0 : index
    %c0_5 = arith.constant 0 : index
    %4 = vector.load %arg3[%c0_4, %c0_5] : memref<1x128xf32, #tpu.memory_space<vmem>>, vector<1x128xf32>
    %5 = vector.broadcast %4 : vector<1x128xf32> to vector<64x128xf32>
    %6 = arith.addf %3, %5 : vector<64x128xf32>
    %c0_6 = arith.constant 0 : index
    %c0_7 = arith.constant 0 : index
    %c0_8 = arith.constant 0 : index
    %7 = vector.load %arg4[%c0_6, %c0_7, %c0_8] : memref<1x64x128xbf16, #tpu.memory_space<vmem>>, vector<1x64x128xbf16>
    %8 = vector.shape_cast %7 : vector<1x64x128xbf16> to vector<64x128xbf16>
    %9 = arith.extf %8 : vector<64x128xbf16> to vector<64x128xf32>
    %10 = arith.addf %6, %9 : vector<64x128xf32>
    %cst_9 = arith.constant 0.000000e+00 : f32
    %11 = vector.broadcast %cst_9 : f32 to vector<64x128xf32>
    %12 = arith.maximumf %10, %11 : vector<64x128xf32>
    %13 = arith.truncf %12 : vector<64x128xf32> to vector<64x128xbf16>
    %c0_10 = arith.constant 0 : index
    %c0_11 = arith.constant 0 : index
    %c0_12 = arith.constant 0 : index
    %14 = vector.load %arg5[%c0_10, %c0_11, %c0_12] : memref<1x64x128xbf16, #tpu.memory_space<vmem>>, vector<1x64x128xbf16>
    %15 = vector.shape_cast %14 : vector<1x64x128xbf16> to vector<64x128xbf16>
    %16 = vector.shape_cast %13 : vector<64x128xbf16> to vector<1x64x128xbf16>
    tpu.vector_store %arg5[%c0_10, %c0_11, %c0_12], %16 {strides = array<i32>} : memref<1x64x128xbf16, #tpu.memory_space<vmem>>, vector<1x64x128xbf16>,
    return
  }
  func.func @transform_0(%arg0: i32) -> (i32, i32, i32) {
    %c0_i32 = arith.constant 0 : i32
    %c0_i32_0 = arith.constant 0 : i32
    %c0_i32_1 = arith.constant 0 : i32
    return %arg0, %c0_i32, %c0_i32_0 : i32, i32, i32
  }
  func.func @transform_1(%arg0: i32) -> (i32, i32) {
    %c0_i32 = arith.constant 0 : i32
    %c0_i32_0 = arith.constant 0 : i32
    %c0_i32_1 = arith.constant 0 : i32
    return %c0_i32, %c0_i32_0 : i32, i32
  }
  func.func @transform_2(%arg0: i32) -> (i32, i32) {
    %c0_i32 = arith.constant 0 : i32
    %c0_i32_0 = arith.constant 0 : i32
    %c0_i32_1 = arith.constant 0 : i32
    return %c0_i32, %c0_i32_0 : i32, i32
  }
  func.func @transform_3(%arg0: i32) -> (i32, i32, i32) {
    %c0_i32 = arith.constant 0 : i32
    %c0_i32_0 = arith.constant 0 : i32
    %c0_i32_1 = arith.constant 0 : i32
    return %arg0, %c0_i32, %c0_i32_0 : i32, i32, i32
  }
  func.func @transform_4(%arg0: i32) -> (i32, i32, i32) {
    %c0_i32 = arith.constant 0 : i32
    %c0_i32_0 = arith.constant 0 : i32
    %c0_i32_1 = arith.constant 0 : i32
    return %arg0, %c0_i32, %c0_i32_0 : i32, i32, i32
  }
}

module attributes {stable_mosaic.version = 11 : i64} {
  func.func @kernel(%arg0: i32, %arg1: memref<1x64x256xbf16, #tpu.memory_space<vmem>>, %arg2: memref<256x128xbf16, #tpu.memory_space<vmem>>, %arg3: memref<1x128xf32, #tpu.memory_space<vmem>>, %arg4: memref<1x64x128xbf16, #tpu.memory_space<vmem>>) attributes {dimension_semantics = [#tpu.dimension_semantics<parallel>], iteration_bounds = array<i64: 2>, scalar_prefetch = 0 : i64, scratch_operands = 0 : i64, tpu.core_type = #tpu.core_type<tc>, window_params = [{transform_indices = @transform_0, window_bounds = array<i64: 1, 64, 256>}, {pipeline_mode = #tpu.pipeline_mode<synchronous>, transform_indices = @transform_1, window_bounds = array<i64: 256, 128>}, {pipeline_mode = #tpu.pipeline_mode<synchronous>, transform_indices = @transform_2, window_bounds = array<i64: 1, 128>}, {transform_indices = @transform_3, window_bounds = array<i64: 1, 64, 128>}]} {
    %c0 = arith.constant 0 : index
    %c0_0 = arith.constant 0 : index
    %c0_1 = arith.constant 0 : index
    %0 = vector.load %arg1[%c0, %c0_0, %c0_1] : memref<1x64x256xbf16, #tpu.memory_space<vmem>>, vector<1x64x256xbf16>
    %1 = vector.shape_cast %0 : vector<1x64x256xbf16> to vector<64x256xbf16>
    %c0_2 = arith.constant 0 : index
    %c0_3 = arith.constant 0 : index
    %2 = vector.load %arg2[%c0_2, %c0_3] : memref<256x128xbf16, #tpu.memory_space<vmem>>, vector<256x128xbf16>
    %cst = arith.constant dense<0.000000e+00> : vector<64x128xf32>
    %3 = tpu.matmul %1, %2, %cst {dimension_numbers = #tpu.dot_dimension_numbers<[1], [0], [0], [1], [0, 0, 1, 1], [], []>} : vector<64x256xbf16>, vector<256x128xbf16>, vector<64x128xf32> -> vector<64x128xf32>
    %c0_4 = arith.constant 0 : index
    %c0_5 = arith.constant 0 : index
    %4 = vector.load %arg3[%c0_4, %c0_5] : memref<1x128xf32, #tpu.memory_space<vmem>>, vector<1x128xf32>
    %5 = vector.broadcast %4 : vector<1x128xf32> to vector<64x128xf32>
    %6 = arith.addf %3, %5 : vector<64x128xf32>
    %cst_6 = arith.constant 0.000000e+00 : f32
    %7 = vector.broadcast %cst_6 : f32 to vector<64x128xf32>
    %8 = arith.maximumf %6, %7 : vector<64x128xf32>
    %9 = arith.truncf %8 : vector<64x128xf32> to vector<64x128xbf16>
    %c0_7 = arith.constant 0 : index
    %c0_8 = arith.constant 0 : index
    %c0_9 = arith.constant 0 : index
    %10 = vector.load %arg4[%c0_7, %c0_8, %c0_9] : memref<1x64x128xbf16, #tpu.memory_space<vmem>>, vector<1x64x128xbf16>
    %11 = vector.shape_cast %10 : vector<1x64x128xbf16> to vector<64x128xbf16>
    %12 = vector.shape_cast %9 : vector<64x128xbf16> to vector<1x64x128xbf16>
    tpu.vector_store %arg4[%c0_7, %c0_8, %c0_9], %12 {strides = array<i32>} : memref<1x64x128xbf16, #tpu.memory_space<vmem>>, vector<1x64x128xbf16>,
    return
  }
  func.func @transform_0(%arg0: i32) -> (i32, i32, i32) {
    %c0_i32 = arith.constant 0 : i32
    %c0_i32_0 = arith.constant 0 : i32
    %c0_i32_1 = arith.constant 0 : i32
    return %arg0, %c0_i32, %c0_i32_0 : i32, i32, i32
  }
  func.func @transform_1(%arg0: i32) -> (i32, i32) {
    %c0_i32 = arith.constant 0 : i32
    %c0_i32_0 = arith.constant 0 : i32
    %c0_i32_1 = arith.constant 0 : i32
    return %c0_i32, %c0_i32_0 : i32, i32
  }
  func.func @transform_2(%arg0: i32) -> (i32, i32) {
    %c0_i32 = arith.constant 0 : i32
    %c0_i32_0 = arith.constant 0 : i32
    %c0_i32_1 = arith.constant 0 : i32
    return %c0_i32, %c0_i32_0 : i32, i32
  }
  func.func @transform_3(%arg0: i32) -> (i32, i32, i32) {
    %c0_i32 = arith.constant 0 : i32
    %c0_i32_0 = arith.constant 0 : i32
    %c0_i32_1 = arith.constant 0 : i32
    return %arg0, %c0_i32, %c0_i32_0 : i32, i32, i32
  }
}

</mosaic_0001>

<llo_original>
// kernel: _lambda_.5
$region0: #{_lambda_.5}
  #allocation0 [shape = 'u32[]', space=smem, size = 0x4, offset = 0x4, fixed_abs, tag = 'smem constant byte address 0x4 - core index']
  #allocation1 [shape = 'u32[72,128]{1,0:T(1,128)}', space=vmem, size = 0x9000, scoped, tag = 'internal scratch']
  %s0 = inlined_call_operand.vmem [shape: bf16[2,64,128], index: 0, kind: input, shape index: {}]
  %s1 = inlined_call_operand.vmem [shape: bf16[128,128], index: 1, kind: input, shape index: {}]
  %s2 = inlined_call_operand.vmem [shape: f32[1,128], index: 2, kind: input, shape index: {}]
  %s3 = inlined_call_operand.vmem [shape: bf16[2,64,128], index: 3, kind: output, shape index: {}]
  %s4 = sld [smem:[#allocation0]]
  $region45: #{_lambda_.5} parent=0
    _
  %s6 = ssub.s32 1, %s4
  %s7 = scalar_select 0, %s6, %s4
  loop: start=0, step=1, limit=4
  $region2: #{_lambda_.5} parent=0 // loop_pre_header
    _
  $region3: #{_lambda_.5} parent=0 // loop_header
    %s9 = sphi 0, %s13
    %p10 = scmp.ge.s32.totalorder %s9, 4
    %s19 = sphi 0, %s21
    %s22 = sphi 0, %s19
    %s23 = sphi 0, %s22
    %s39 = sphi 0, %s23
    %s43 = sphi 0, %s43
    %s45 = sphi 0, %s43
    %s46 = sphi 0, %s45
    %s60 = sphi 0, %s46
    %s64 = sphi 0, %s64
    %s66 = sphi 0, %s64
    %s67 = sphi 0, %s66
    %s81 = sphi 0, %s67
    %s87 = sphi 0, %s89
    %s90 = sphi 0, %s87
    %s91 = sphi 0, %s90
    %s107 = sphi 0, %s91
  $region4: #{_lambda_.5} parent=0 // loop_header_branch
    %12 = sbr.rel (%p10) target = $region8
  $region5: #{_lambda_.5} parent=0 // loop_body
    %s14 = ssub.s32 %s9, 1
    %s15 = ssub.s32 %s9, 2
    %s16 = sadd.s32 %s9, 1
    %s17 = ssub.s32 %s9, %s16
    %p18 = scmp.eq.s32.totalorder %s17, 0
    %s20 = sadd.s32 %s19, 1
    %s21 = scalar_select %p18, %s19, %s20
    %p24 = pneg %p18
    %p25 = scmp.eq.s32.totalorder %s9, 1
    %p26 = por %p24, %p25
    %p27 = scmp.ne.s32.totalorder %s19, %s22
    %p28 = scmp.eq.s32.totalorder %s9, 0
    %p29 = por %p27, %p28
    %p30 = scmp.ne.s32.totalorder %s19, %s22
    %p31 = scmp.eq.s32.totalorder %s14, 1
    %p32 = por %p30, %p31
    %p33 = scmp.ne.s32.totalorder %s22, %s23
    %p34 = scmp.eq.s32.totalorder %s14, 0
    %p35 = por %p33, %p34
    %p36 = scmp.ne.s32.totalorder %s22, %s23
    %p37 = scmp.eq.s32.totalorder %s15, 1
    %p38 = por %p36, %p37
    %p40 = scmp.ne.s32.totalorder %s23, %s39
    %p41 = scmp.eq.s32.totalorder %s15, 0
    %p42 = por %p40, %p41
    %s44 = sadd.s32 %s43, 1
    %p47 = scmp.eq.s32.totalorder %s9, 1
    %p48 = scmp.ne.s32.totalorder %s43, %s45
    %p49 = scmp.eq.s32.totalorder %s9, 0
    %p50 = por %p48, %p49
    %p51 = scmp.ne.s32.totalorder %s43, %s45
    %p52 = scmp.eq.s32.totalorder %s14, 1
    %p53 = por %p51, %p52
    %p54 = scmp.ne.s32.totalorder %s45, %s46
    %p55 = scmp.eq.s32.totalorder %s14, 0
    %p56 = por %p54, %p55
    %p57 = scmp.ne.s32.totalorder %s45, %s46
    %p58 = scmp.eq.s32.totalorder %s15, 1
    %p59 = por %p57, %p58
    %p61 = scmp.ne.s32.totalorder %s46, %s60
    %p62 = scmp.eq.s32.totalorder %s15, 0
    %p63 = por %p61, %p62
    %s65 = sadd.s32 %s64, 1
    %p68 = scmp.eq.s32.totalorder %s9, 1
    %p69 = scmp.ne.s32.totalorder %s64, %s66
    %p70 = scmp.eq.s32.totalorder %s9, 0
    %p71 = por %p69, %p70
    %p72 = scmp.ne.s32.totalorder %s64, %s66
    %p73 = scmp.eq.s32.totalorder %s14, 1
    %p74 = por %p72, %p73
    %p75 = scmp.ne.s32.totalorder %s66, %s67
    %p76 = scmp.eq.s32.totalorder %s14, 0
    %p77 = por %p75, %p76
    %p78 = scmp.ne.s32.totalorder %s66, %s67
    %p79 = scmp.eq.s32.totalorder %s15, 1
    %p80 = por %p78, %p79
    %p82 = scmp.ne.s32.totalorder %s67, %s81
    %p83 = scmp.eq.s32.totalorder %s15, 0
    %p84 = por %p82, %p83
    %s85 = ssub.s32 %s9, %s16
    %p86 = scmp.eq.s32.totalorder %s85, 0
    %s88 = sadd.s32 %s87, 1
    %s89 = scalar_select %p86, %s87, %s88
    %p92 = pneg %p86
    %p93 = scmp.eq.s32.totalorder %s9, 1
    %p94 = por %p92, %p93
    %p95 = scmp.ne.s32.totalorder %s87, %s90
    %p96 = scmp.eq.s32.totalorder %s9, 0
    %p97 = por %p95, %p96
    %p98 = scmp.ne.s32.totalorder %s87, %s90
    %p99 = scmp.eq.s32.totalorder %s14, 1
    %p100 = por %p98, %p99
    %p101 = scmp.ne.s32.totalorder %s90, %s91
    %p102 = scmp.eq.s32.totalorder %s14, 0
    %p103 = por %p101, %p102
    %p104 = scmp.ne.s32.totalorder %s90, %s91
    %p105 = scmp.eq.s32.totalorder %s15, 1
    %p106 = por %p104, %p105
    %p108 = scmp.ne.s32.totalorder %s91, %s107
    %p109 = scmp.eq.s32.totalorder %s15, 0
    %p110 = por %p108, %p109
    %p111 = scmp.le.s32.totalorder 1, %s9
    %p112 = scmp.lt.s32.totalorder %s9, 3
    %p113 = pnand %p111, %p112
    %p114 = pneg %p113
    // Predicated region
    $region9: #{_lambda_.5} parent=5 // pred_check
      _
    $region10: #{_lambda_.5} parent=5 // pred_check_branch
      %116 = sbr.rel (%p113) target = $region12
    $region11: #{_lambda_.5} parent=5 // pred_region
      %s117 = ssub.s32 %s9, 1
      // Predicated region
      $region13: #{_lambda_.5} parent=11 // pred_check
        %p118 = pneg %p56
      $region14: #{_lambda_.5} parent=11 // pred_check_branch
        %120 = sbr.rel (%p118) target = $region16
      $region15: #{_lambda_.5} parent=11 // pred_region
        _
      $region16: #{_lambda_.5} parent=11 // pred_fallthru
        _
      // Predicated region
      $region17: #{_lambda_.5} parent=11 // pred_check
        %p121 = pneg %p77
      $region18: #{_lambda_.5} parent=11 // pred_check_branch
        %123 = sbr.rel (%p121) target = $region20
      $region19: #{_lambda_.5} parent=11 // pred_region
        _
      $region20: #{_lambda_.5} parent=11 // pred_fallthru
        _
    $region12: #{_lambda_.5} parent=5 // pred_fallthru
      _
    %p124 = scmp.lt.s32.totalorder %s9, 2
    // Predicated region
    $region21: #{_lambda_.5} parent=5 // pred_check
      %p125 = pneg %p124
    $region22: #{_lambda_.5} parent=5 // pred_check_branch
      %127 = sbr.rel (%p125) target = $region24
    $region23: #{_lambda_.5} parent=5 // pred_region
      // Predicated region
      $region25: #{_lambda_.5} parent=23 // pred_check
        %p128 = pneg %p29
      $region26: #{_lambda_.5} parent=23 // pred_check_branch
        %130 = sbr.rel (%p128) target = $region28
      $region27: #{_lambda_.5} parent=23 // pred_region
        %p131 = scmp.lt.s32.totalorder %s9, 1
        %s132 = scalar_select %p131, %s9, 1
        %s133 = smul.addr %s132, 8
        %s134 = smul.addr %s133, 4
        %s135 = scalar_lea.vmem %s0, %s134
      $region28: #{_lambda_.5} parent=23 // pred_fallthru
        _
    $region24: #{_lambda_.5} parent=5 // pred_fallthru
      _
    %p136 = scmp.le.s32.totalorder 1, %s9
    %p137 = scmp.lt.s32.totalorder %s9, 3
    %p138 = pnand %p136, %p137
    %p139 = pneg %p138
    // Predicated region
    $region29: #{_lambda_.5} parent=5 // pred_check
      _
    $region30: #{_lambda_.5} parent=5 // pred_check_branch
      %141 = sbr.rel (%p138) target = $region32
    $region31: #{_lambda_.5} parent=5 // pred_region
      %s142 = ssub.s32 %s9, 1
      %p143 = scmp.lt.s32.totalorder %s14, 1
      %s144 = scalar_select %p143, %s14, 1
      %s145 = smul.addr %s144, 8
      %s146 = smul.addr %s145, 4
      %s147 = scalar_lea.vmem %s0, %s146
      %p148 = pneg %p35
      %p149 = pneg %p32
      %p150 = pneg %p56
      %p151 = pneg %p53
      %p152 = pneg %p77
      %p153 = pneg %p74
      %p154 = pneg %p103
      %p155 = pneg %p100
      %p156 = scmp.lt.s32.totalorder %s14, 1
      %s157 = scalar_select %p156, %s14, 1
      %s158 = smul.addr %s157, 8
      %s159 = smul.addr %s158, 4
      %s160 = scalar_lea.vmem %s3, %s159
      %p161 = scmp.lt.s32.totalorder %s14, 1
      %s162 = scalar_select %p161, %s14, 1
      %s163 = smul.addr %s162, 8
      %s164 = smul.addr %s163, 4
      %s165 = scalar_lea.vmem %s0, %s164
      %p166 = scmp.lt.s32.totalorder %s14, 1
      %s167 = scalar_select %p166, %s14, 1
      %s168 = smul.addr %s167, 8
      %s169 = smul.addr %s168, 4
      %s170 = scalar_lea.vmem %s3, %s169
      %v171 = vld [vmem:[%s165] sm:$0xf]
      %v172 = vld [vmem:[%s165 + $0x4] sm:$0xf]
      %v173 = vld [vmem:[%s165 + $0x8] sm:$0xf]
      %v174 = vld [vmem:[%s165 + $0xc] sm:$0xf]
      %v175 = vld [vmem:[%s165 + $0x10] sm:$0xf]
      %v176 = vld [vmem:[%s165 + $0x14] sm:$0xf]
      %v177 = vld [vmem:[%s165 + $0x18] sm:$0xf]
      %v178 = vld [vmem:[%s165 + $0x1c] sm:$0xf]
      %v179 = vld [vmem:[%s1] sm:$0xf]
      %v180 = vld [vmem:[%s1 + $0x4] sm:$0xf]
      %v181 = vld [vmem:[%s1 + $0x8] sm:$0xf]
      %v182 = vld [vmem:[%s1 + $0xc] sm:$0xf]
      %v183 = vld [vmem:[%s1 + $0x10] sm:$0xf]
      %v184 = vld [vmem:[%s1 + $0x14] sm:$0xf]
      %v185 = vld [vmem:[%s1 + $0x18] sm:$0xf]
      %v186 = vld [vmem:[%s1 + $0x1c] sm:$0xf]
      %v187 = vld [vmem:[%s1 + $0x20] sm:$0xf]
      %v188 = vld [vmem:[%s1 + $0x24] sm:$0xf]
      %v189 = vld [vmem:[%s1 + $0x28] sm:$0xf]
      %v190 = vld [vmem:[%s1 + $0x2c] sm:$0xf]
      %v191 = vld [vmem:[%s1 + $0x30] sm:$0xf]
      %v192 = vld [vmem:[%s1 + $0x34] sm:$0xf]
      %v193 = vld [vmem:[%s1 + $0x38] sm:$0xf]
      %v194 = vld [vmem:[%s1 + $0x3c] sm:$0xf]
      %v195 = vld [vmem:[%s2] sm:$0x1]
      %v197 = vperm.slane %v195, 0
      %v207 = vunpack.c.l.b16 %v171
      %v208 = vunpack.c.l.b16 %v172
      %v209 = vunpack.c.l.b16 %v173
      %v210 = vunpack.c.l.b16 %v174
      %v211 = vunpack.c.l.b16 %v175
      %v212 = vunpack.c.l.b16 %v176
      %v213 = vunpack.c.l.b16 %v177
      %v214 = vunpack.c.l.b16 %v178
      %v215 = vpack.c.b16 %v208, %v207
      %v216 = vpack.c.b16 %v210, %v209
      %v217 = vpack.c.b16 %v212, %v211
      %v218 = vpack.c.b16 %v214, %v213
      %v239 = vunpack.c.l.b16 %v179
      %v240 = vunpack.c.l.b16 %v180
      %v241 = vunpack.c.l.b16 %v181
      %v242 = vunpack.c.l.b16 %v182
      %v243 = vunpack.c.l.b16 %v183
      %v244 = vunpack.c.l.b16 %v184
      %v245 = vunpack.c.l.b16 %v185
      %v246 = vunpack.c.l.b16 %v186
      %v247 = vunpack.c.l.b16 %v187
      %v248 = vunpack.c.l.b16 %v188
      %v249 = vunpack.c.l.b16 %v189
      %v250 = vunpack.c.l.b16 %v190
      %v251 = vunpack.c.l.b16 %v191
      %v252 = vunpack.c.l.b16 %v192
      %v253 = vunpack.c.l.b16 %v193
      %v254 = vunpack.c.l.b16 %v194
      %v255 = vpack.c.b16 %v240, %v239
      %v256 = vpack.c.b16 %v242, %v241
      %v257 = vpack.c.b16 %v244, %v243
      %v258 = vpack.c.b16 %v246, %v245
      %v259 = vpack.c.b16 %v248, %v247
      %v260 = vpack.c.b16 %v250, %v249
      %v261 = vpack.c.b16 %v252, %v251
      %v262 = vpack.c.b16 %v254, %v253
      %271 = vmatpush.bf16.msra.mxu0 %v262
      %272 = vmatpush.bf16.msra.mxu0 %v261
      %273 = vmatpush.bf16.msra.mxu0 %v260
      %274 = vmatpush.bf16.msra.mxu0 %v259
      %275 = vmatpush.bf16.msra.mxu0 %v258
      %276 = vmatpush.bf16.msra.mxu0 %v257
      %277 = vmatpush.bf16.msra.mxu0 %v256
      %278 = vmatpush.bf16.msra.mxu0 %v255
      %279 = vmatmul.bf16.gmra.mxu0 %v215
      %v280 = vpop.f32.mrf.mxu0
      %v281 = vadd.f32 %v197, %v280
      %v282 = vpop.f32.mrf.mxu0
      %v283 = vadd.f32 %v197, %v282
      %284 = vmatmul.bf16.gmra.mxu0 %v216
      %v285 = vpop.f32.mrf.mxu0
      %v286 = vadd.f32 %v197, %v285
      %v287 = vpop.f32.mrf.mxu0
      %v288 = vadd.f32 %v197, %v287
      %289 = vmatmul.bf16.gmra.mxu0 %v217
      %v290 = vpop.f32.mrf.mxu0
      %v291 = vadd.f32 %v197, %v290
      %v292 = vpop.f32.mrf.mxu0
      %v293 = vadd.f32 %v197, %v292
      %294 = vmatmul.bf16.gmra.mxu0 %v218
      %v295 = vpop.f32.mrf.mxu0
      %v296 = vadd.f32 %v197, %v295
      %v297 = vpop.f32.mrf.mxu0
      %v298 = vadd.f32 %v197, %v297
      %299 = vdwg.mxu0
      %v300 = vpack.c.bf16 %v281, %v281
      %v301 = vpack.c.bf16 %v283, %v283
      %v302 = vpack.c.bf16 %v286, %v286
      %v303 = vpack.c.bf16 %v288, %v288
      %v304 = vpack.c.bf16 %v291, %v291
      %v305 = vpack.c.bf16 %v293, %v293
      %v306 = vpack.c.bf16 %v296, %v296
      %v307 = vpack.c.bf16 %v298, %v298
      %308 = vst [vmem:[%s170] sm:$0xf] %v300
      %309 = vst [vmem:[%s170 + $0x4] sm:$0xf] %v301
      %310 = vst [vmem:[%s170 + $0x8] sm:$0xf] %v302
      %311 = vst [vmem:[%s170 + $0xc] sm:$0xf] %v303
      %312 = vst [vmem:[%s170 + $0x10] sm:$0xf] %v304
      %313 = vst [vmem:[%s170 + $0x14] sm:$0xf] %v305
      %314 = vst [vmem:[%s170 + $0x18] sm:$0xf] %v306
      %315 = vst [vmem:[%s170 + $0x1c] sm:$0xf] %v307
      %p316 = scmp.lt.s32.totalorder %s14, 1
      %s317 = scalar_select %p316, %s14, 1
      %s318 = smul.addr %s317, 8
      %s319 = smul.addr %s318, 4
      %s320 = scalar_lea.vmem %s3, %s319
      // Predicated region
      $region33: #{_lambda_.5} parent=31 // pred_check
        %p321 = pneg %p100
      $region34: #{_lambda_.5} parent=31 // pred_check_branch
        %323 = sbr.rel (%p321) target = $region36
      $region35: #{_lambda_.5} parent=31 // pred_region
        _
      $region36: #{_lambda_.5} parent=31 // pred_fallthru
        _
    $region32: #{_lambda_.5} parent=5 // pred_fallthru
      _
    %p324 = scmp.le.s32.totalorder 2, %s9
    // Predicated region
    $region37: #{_lambda_.5} parent=5 // pred_check
      %p325 = pneg %p324
    $region38: #{_lambda_.5} parent=5 // pred_check_branch
      %327 = sbr.rel (%p325) target = $region40
    $region39: #{_lambda_.5} parent=5 // pred_region
      %s328 = ssub.s32 %s9, 2
      // Predicated region
      $region41: #{_lambda_.5} parent=39 // pred_check
        %p329 = pneg %p106
      $region42: #{_lambda_.5} parent=39 // pred_check_branch
        %331 = sbr.rel (%p329) target = $region44
      $region43: #{_lambda_.5} parent=39 // pred_region
        %p332 = scmp.lt.s32.totalorder %s15, 1
        %s333 = scalar_select %p332, %s15, 1
        %s334 = smul.addr %s333, 8
        %s335 = smul.addr %s334, 4
        %s336 = scalar_lea.vmem %s3, %s335
      $region44: #{_lambda_.5} parent=39 // pred_fallthru
        _
    $region40: #{_lambda_.5} parent=5 // pred_fallthru
      _
  $region6: #{_lambda_.5} parent=0 // loop_footer
    %s13 = sadd.s32 1, %s9
  $region7: #{_lambda_.5} parent=0 // loop_footer_branch
    %8 = sbr.rel target = $region3
  $region8: #{_lambda_.5} parent=0 // loop_exit
    _

// kernel: _lambda_.6
$region0: #{_lambda_.6}
  #allocation0 [shape = 'u32[]', space=smem, size = 0x4, offset = 0x4, fixed_abs, tag = 'smem constant byte address 0x4 - core index']
  #allocation1 [shape = 'u32[72,128]{1,0:T(1,128)}', space=vmem, size = 0x9000, scoped, tag = 'internal scratch']
  %s0 = inlined_call_operand.vmem [shape: bf16[2,64,128], index: 0, kind: input, shape index: {}]
  %s1 = inlined_call_operand.vmem [shape: bf16[128,128], index: 1, kind: input, shape index: {}]
  %s2 = inlined_call_operand.vmem [shape: f32[1,128], index: 2, kind: input, shape index: {}]
  %s3 = inlined_call_operand.vmem [shape: bf16[2,64,128], index: 3, kind: output, shape index: {}]
  %s4 = sld [smem:[#allocation0]]
  $region45: #{_lambda_.6} parent=0
    _
  %s6 = ssub.s32 1, %s4
  %s7 = scalar_select 0, %s6, %s4
  loop: start=0, step=1, limit=4
  $region2: #{_lambda_.6} parent=0 // loop_pre_header
    _
  $region3: #{_lambda_.6} parent=0 // loop_header
    %s9 = sphi 0, %s13
    %p10 = scmp.ge.s32.totalorder %s9, 4
    %s19 = sphi 0, %s21
    %s22 = sphi 0, %s19
    %s23 = sphi 0, %s22
    %s39 = sphi 0, %s23
    %s43 = sphi 0, %s43
    %s45 = sphi 0, %s43
    %s46 = sphi 0, %s45
    %s60 = sphi 0, %s46
    %s64 = sphi 0, %s64
    %s66 = sphi 0, %s64
    %s67 = sphi 0, %s66
    %s81 = sphi 0, %s67
    %s87 = sphi 0, %s89
    %s90 = sphi 0, %s87
    %s91 = sphi 0, %s90
    %s107 = sphi 0, %s91
  $region4: #{_lambda_.6} parent=0 // loop_header_branch
    %12 = sbr.rel (%p10) target = $region8
  $region5: #{_lambda_.6} parent=0 // loop_body
    %s14 = ssub.s32 %s9, 1
    %s15 = ssub.s32 %s9, 2
    %s16 = sadd.s32 %s9, 1
    %s17 = ssub.s32 %s9, %s16
    %p18 = scmp.eq.s32.totalorder %s17, 0
    %s20 = sadd.s32 %s19, 1
    %s21 = scalar_select %p18, %s19, %s20
    %p24 = pneg %p18
    %p25 = scmp.eq.s32.totalorder %s9, 1
    %p26 = por %p24, %p25
    %p27 = scmp.ne.s32.totalorder %s19, %s22
    %p28 = scmp.eq.s32.totalorder %s9, 0
    %p29 = por %p27, %p28
    %p30 = scmp.ne.s32.totalorder %s19, %s22
    %p31 = scmp.eq.s32.totalorder %s14, 1
    %p32 = por %p30, %p31
    %p33 = scmp.ne.s32.totalorder %s22, %s23
    %p34 = scmp.eq.s32.totalorder %s14, 0
    %p35 = por %p33, %p34
    %p36 = scmp.ne.s32.totalorder %s22, %s23
    %p37 = scmp.eq.s32.totalorder %s15, 1
    %p38 = por %p36, %p37
    %p40 = scmp.ne.s32.totalorder %s23, %s39
    %p41 = scmp.eq.s32.totalorder %s15, 0
    %p42 = por %p40, %p41
    %s44 = sadd.s32 %s43, 1
    %p47 = scmp.eq.s32.totalorder %s9, 1
    %p48 = scmp.ne.s32.totalorder %s43, %s45
    %p49 = scmp.eq.s32.totalorder %s9, 0
    %p50 = por %p48, %p49
    %p51 = scmp.ne.s32.totalorder %s43, %s45
    %p52 = scmp.eq.s32.totalorder %s14, 1
    %p53 = por %p51, %p52
    %p54 = scmp.ne.s32.totalorder %s45, %s46
    %p55 = scmp.eq.s32.totalorder %s14, 0
    %p56 = por %p54, %p55
    %p57 = scmp.ne.s32.totalorder %s45, %s46
    %p58 = scmp.eq.s32.totalorder %s15, 1
    %p59 = por %p57, %p58
    %p61 = scmp.ne.s32.totalorder %s46, %s60
    %p62 = scmp.eq.s32.totalorder %s15, 0
    %p63 = por %p61, %p62
    %s65 = sadd.s32 %s64, 1
    %p68 = scmp.eq.s32.totalorder %s9, 1
    %p69 = scmp.ne.s32.totalorder %s64, %s66
    %p70 = scmp.eq.s32.totalorder %s9, 0
    %p71 = por %p69, %p70
    %p72 = scmp.ne.s32.totalorder %s64, %s66
    %p73 = scmp.eq.s32.totalorder %s14, 1
    %p74 = por %p72, %p73
    %p75 = scmp.ne.s32.totalorder %s66, %s67
    %p76 = scmp.eq.s32.totalorder %s14, 0
    %p77 = por %p75, %p76
    %p78 = scmp.ne.s32.totalorder %s66, %s67
    %p79 = scmp.eq.s32.totalorder %s15, 1
    %p80 = por %p78, %p79
    %p82 = scmp.ne.s32.totalorder %s67, %s81
    %p83 = scmp.eq.s32.totalorder %s15, 0
    %p84 = por %p82, %p83
    %s85 = ssub.s32 %s9, %s16
    %p86 = scmp.eq.s32.totalorder %s85, 0
    %s88 = sadd.s32 %s87, 1
    %s89 = scalar_select %p86, %s87, %s88
    %p92 = pneg %p86
    %p93 = scmp.eq.s32.totalorder %s9, 1
    %p94 = por %p92, %p93
    %p95 = scmp.ne.s32.totalorder %s87, %s90
    %p96 = scmp.eq.s32.totalorder %s9, 0
    %p97 = por %p95, %p96
    %p98 = scmp.ne.s32.totalorder %s87, %s90
    %p99 = scmp.eq.s32.totalorder %s14, 1
    %p100 = por %p98, %p99
    %p101 = scmp.ne.s32.totalorder %s90, %s91
    %p102 = scmp.eq.s32.totalorder %s14, 0
    %p103 = por %p101, %p102
    %p104 = scmp.ne.s32.totalorder %s90, %s91
    %p105 = scmp.eq.s32.totalorder %s15, 1
    %p106 = por %p104, %p105
    %p108 = scmp.ne.s32.totalorder %s91, %s107
    %p109 = scmp.eq.s32.totalorder %s15, 0
    %p110 = por %p108, %p109
    %p111 = scmp.le.s32.totalorder 1, %s9
    %p112 = scmp.lt.s32.totalorder %s9, 3
    %p113 = pnand %p111, %p112
    %p114 = pneg %p113
    // Predicated region
    $region9: #{_lambda_.6} parent=5 // pred_check
      _
    $region10: #{_lambda_.6} parent=5 // pred_check_branch
      %116 = sbr.rel (%p113) target = $region12
    $region11: #{_lambda_.6} parent=5 // pred_region
      %s117 = ssub.s32 %s9, 1
      // Predicated region
      $region13: #{_lambda_.6} parent=11 // pred_check
        %p118 = pneg %p56
      $region14: #{_lambda_.6} parent=11 // pred_check_branch
        %120 = sbr.rel (%p118) target = $region16
      $region15: #{_lambda_.6} parent=11 // pred_region
        _
      $region16: #{_lambda_.6} parent=11 // pred_fallthru
        _
      // Predicated region
      $region17: #{_lambda_.6} parent=11 // pred_check
        %p121 = pneg %p77
      $region18: #{_lambda_.6} parent=11 // pred_check_branch
        %123 = sbr.rel (%p121) target = $region20
      $region19: #{_lambda_.6} parent=11 // pred_region
        _
      $region20: #{_lambda_.6} parent=11 // pred_fallthru
        _
    $region12: #{_lambda_.6} parent=5 // pred_fallthru
      _
    %p124 = scmp.lt.s32.totalorder %s9, 2
    // Predicated region
    $region21: #{_lambda_.6} parent=5 // pred_check
      %p125 = pneg %p124
    $region22: #{_lambda_.6} parent=5 // pred_check_branch
      %127 = sbr.rel (%p125) target = $region24
    $region23: #{_lambda_.6} parent=5 // pred_region
      // Predicated region
      $region25: #{_lambda_.6} parent=23 // pred_check
        %p128 = pneg %p29
      $region26: #{_lambda_.6} parent=23 // pred_check_branch
        %130 = sbr.rel (%p128) target = $region28
      $region27: #{_lambda_.6} parent=23 // pred_region
        %p131 = scmp.lt.s32.totalorder %s9, 1
        %s132 = scalar_select %p131, %s9, 1
        %s133 = smul.addr %s132, 8
        %s134 = smul.addr %s133, 4
        %s135 = scalar_lea.vmem %s0, %s134
      $region28: #{_lambda_.6} parent=23 // pred_fallthru
        _
    $region24: #{_lambda_.6} parent=5 // pred_fallthru
      _
    %p136 = scmp.le.s32.totalorder 1, %s9
    %p137 = scmp.lt.s32.totalorder %s9, 3
    %p138 = pnand %p136, %p137
    %p139 = pneg %p138
    // Predicated region
    $region29: #{_lambda_.6} parent=5 // pred_check
      _
    $region30: #{_lambda_.6} parent=5 // pred_check_branch
      %141 = sbr.rel (%p138) target = $region32
    $region31: #{_lambda_.6} parent=5 // pred_region
      %s142 = ssub.s32 %s9, 1
      %p143 = scmp.lt.s32.totalorder %s14, 1
      %s144 = scalar_select %p143, %s14, 1
      %s145 = smul.addr %s144, 8
      %s146 = smul.addr %s145, 4
      %s147 = scalar_lea.vmem %s0, %s146
      %p148 = pneg %p35
      %p149 = pneg %p32
      %p150 = pneg %p56
      %p151 = pneg %p53
      %p152 = pneg %p77
      %p153 = pneg %p74
      %p154 = pneg %p103
      %p155 = pneg %p100
      %p156 = scmp.lt.s32.totalorder %s14, 1
      %s157 = scalar_select %p156, %s14, 1
      %s158 = smul.addr %s157, 8
      %s159 = smul.addr %s158, 4
      %s160 = scalar_lea.vmem %s3, %s159
      %p161 = scmp.lt.s32.totalorder %s14, 1
      %s162 = scalar_select %p161, %s14, 1
      %s163 = smul.addr %s162, 8
      %s164 = smul.addr %s163, 4
      %s165 = scalar_lea.vmem %s0, %s164
      %p166 = scmp.lt.s32.totalorder %s14, 1
      %s167 = scalar_select %p166, %s14, 1
      %s168 = smul.addr %s167, 8
      %s169 = smul.addr %s168, 4
      %s170 = scalar_lea.vmem %s3, %s169
      %v171 = vld [vmem:[%s165] sm:$0xf]
      %v172 = vld [vmem:[%s165 + $0x4] sm:$0xf]
      %v173 = vld [vmem:[%s165 + $0x8] sm:$0xf]
      %v174 = vld [vmem:[%s165 + $0xc] sm:$0xf]
      %v175 = vld [vmem:[%s165 + $0x10] sm:$0xf]
      %v176 = vld [vmem:[%s165 + $0x14] sm:$0xf]
      %v177 = vld [vmem:[%s165 + $0x18] sm:$0xf]
      %v178 = vld [vmem:[%s165 + $0x1c] sm:$0xf]
      %v179 = vld [vmem:[%s1] sm:$0xf]
      %v180 = vld [vmem:[%s1 + $0x4] sm:$0xf]
      %v181 = vld [vmem:[%s1 + $0x8] sm:$0xf]
      %v182 = vld [vmem:[%s1 + $0xc] sm:$0xf]
      %v183 = vld [vmem:[%s1 + $0x10] sm:$0xf]
      %v184 = vld [vmem:[%s1 + $0x14] sm:$0xf]
      %v185 = vld [vmem:[%s1 + $0x18] sm:$0xf]
      %v186 = vld [vmem:[%s1 + $0x1c] sm:$0xf]
      %v187 = vld [vmem:[%s1 + $0x20] sm:$0xf]
      %v188 = vld [vmem:[%s1 + $0x24] sm:$0xf]
      %v189 = vld [vmem:[%s1 + $0x28] sm:$0xf]
      %v190 = vld [vmem:[%s1 + $0x2c] sm:$0xf]
      %v191 = vld [vmem:[%s1 + $0x30] sm:$0xf]
      %v192 = vld [vmem:[%s1 + $0x34] sm:$0xf]
      %v193 = vld [vmem:[%s1 + $0x38] sm:$0xf]
      %v194 = vld [vmem:[%s1 + $0x3c] sm:$0xf]
      %v195 = vld [vmem:[%s2] sm:$0x1]
      %v197 = vperm.slane %v195, 0
      %v207 = vunpack.c.l.b16 %v171
      %v208 = vunpack.c.l.b16 %v172
      %v209 = vunpack.c.l.b16 %v173
      %v210 = vunpack.c.l.b16 %v174
      %v211 = vunpack.c.l.b16 %v175
      %v212 = vunpack.c.l.b16 %v176
      %v213 = vunpack.c.l.b16 %v177
      %v214 = vunpack.c.l.b16 %v178
      %v215 = vpack.c.b16 %v208, %v207
      %v216 = vpack.c.b16 %v210, %v209
      %v217 = vpack.c.b16 %v212, %v211
      %v218 = vpack.c.b16 %v214, %v213
      %v239 = vunpack.c.l.b16 %v179
      %v240 = vunpack.c.l.b16 %v180
      %v241 = vunpack.c.l.b16 %v181
      %v242 = vunpack.c.l.b16 %v182
      %v243 = vunpack.c.l.b16 %v183
      %v244 = vunpack.c.l.b16 %v184
      %v245 = vunpack.c.l.b16 %v185
      %v246 = vunpack.c.l.b16 %v186
      %v247 = vunpack.c.l.b16 %v187
      %v248 = vunpack.c.l.b16 %v188
      %v249 = vunpack.c.l.b16 %v189
      %v250 = vunpack.c.l.b16 %v190
      %v251 = vunpack.c.l.b16 %v191
      %v252 = vunpack.c.l.b16 %v192
      %v253 = vunpack.c.l.b16 %v193
      %v254 = vunpack.c.l.b16 %v194
      %v255 = vpack.c.b16 %v240, %v239
      %v256 = vpack.c.b16 %v242, %v241
      %v257 = vpack.c.b16 %v244, %v243
      %v258 = vpack.c.b16 %v246, %v245
      %v259 = vpack.c.b16 %v248, %v247
      %v260 = vpack.c.b16 %v250, %v249
      %v261 = vpack.c.b16 %v252, %v251
      %v262 = vpack.c.b16 %v254, %v253
      %271 = vmatpush.bf16.msra.mxu0 %v262
      %272 = vmatpush.bf16.msra.mxu0 %v261
      %273 = vmatpush.bf16.msra.mxu0 %v260
      %274 = vmatpush.bf16.msra.mxu0 %v259
      %275 = vmatpush.bf16.msra.mxu0 %v258
      %276 = vmatpush.bf16.msra.mxu0 %v257
      %277 = vmatpush.bf16.msra.mxu0 %v256
      %278 = vmatpush.bf16.msra.mxu0 %v255
      %279 = vmatmul.bf16.gmra.mxu0 %v215
      %v280 = vpop.f32.mrf.mxu0
      %v281 = vadd.f32 %v197, %v280
      %v282 = vpop.f32.mrf.mxu0
      %v283 = vadd.f32 %v197, %v282
      %284 = vmatmul.bf16.gmra.mxu0 %v216
      %v285 = vpop.f32.mrf.mxu0
      %v286 = vadd.f32 %v197, %v285
      %v287 = vpop.f32.mrf.mxu0
      %v288 = vadd.f32 %v197, %v287
      %289 = vmatmul.bf16.gmra.mxu0 %v217
      %v290 = vpop.f32.mrf.mxu0
      %v291 = vadd.f32 %v197, %v290
      %v292 = vpop.f32.mrf.mxu0
      %v293 = vadd.f32 %v197, %v292
      %294 = vmatmul.bf16.gmra.mxu0 %v218
      %v295 = vpop.f32.mrf.mxu0
      %v296 = vadd.f32 %v197, %v295
      %v297 = vpop.f32.mrf.mxu0
      %v298 = vadd.f32 %v197, %v297
      %299 = vdwg.mxu0
      %v300 = vmax.f32 %v281, 0.0
      %v301 = vmax.f32 %v283, 0.0
      %v302 = vmax.f32 %v286, 0.0
      %v303 = vmax.f32 %v288, 0.0
      %v304 = vmax.f32 %v291, 0.0
      %v305 = vmax.f32 %v293, 0.0
      %v306 = vmax.f32 %v296, 0.0
      %v307 = vmax.f32 %v298, 0.0
      %v308 = vpack.c.bf16 %v300, %v300
      %v309 = vpack.c.bf16 %v301, %v301
      %v310 = vpack.c.bf16 %v302, %v302
      %v311 = vpack.c.bf16 %v303, %v303
      %v312 = vpack.c.bf16 %v304, %v304
      %v313 = vpack.c.bf16 %v305, %v305
      %v314 = vpack.c.bf16 %v306, %v306
      %v315 = vpack.c.bf16 %v307, %v307
      %316 = vst [vmem:[%s170] sm:$0xf] %v308
      %317 = vst [vmem:[%s170 + $0x4] sm:$0xf] %v309
      %318 = vst [vmem:[%s170 + $0x8] sm:$0xf] %v310
      %319 = vst [vmem:[%s170 + $0xc] sm:$0xf] %v311
      %320 = vst [vmem:[%s170 + $0x10] sm:$0xf] %v312
      %321 = vst [vmem:[%s170 + $0x14] sm:$0xf] %v313
      %322 = vst [vmem:[%s170 + $0x18] sm:$0xf] %v314
      %323 = vst [vmem:[%s170 + $0x1c] sm:$0xf] %v315
      %p324 = scmp.lt.s32.totalorder %s14, 1
      %s325 = scalar_select %p324, %s14, 1
      %s326 = smul.addr %s325, 8
      %s327 = smul.addr %s326, 4
      %s328 = scalar_lea.vmem %s3, %s327
      // Predicated region
      $region33: #{_lambda_.6} parent=31 // pred_check
        %p329 = pneg %p100
      $region34: #{_lambda_.6} parent=31 // pred_check_branch
        %331 = sbr.rel (%p329) target = $region36
      $region35: #{_lambda_.6} parent=31 // pred_region
        _
      $region36: #{_lambda_.6} parent=31 // pred_fallthru
        _
    $region32: #{_lambda_.6} parent=5 // pred_fallthru
      _
    %p332 = scmp.le.s32.totalorder 2, %s9
    // Predicated region
    $region37: #{_lambda_.6} parent=5 // pred_check
      %p333 = pneg %p332
    $region38: #{_lambda_.6} parent=5 // pred_check_branch
      %335 = sbr.rel (%p333) target = $region40
    $region39: #{_lambda_.6} parent=5 // pred_region
      %s336 = ssub.s32 %s9, 2
      // Predicated region
      $region41: #{_lambda_.6} parent=39 // pred_check
        %p337 = pneg %p106
      $region42: #{_lambda_.6} parent=39 // pred_check_branch
        %339 = sbr.rel (%p337) target = $region44
      $region43: #{_lambda_.6} parent=39 // pred_region
        %p340 = scmp.lt.s32.totalorder %s15, 1
        %s341 = scalar_select %p340, %s15, 1
        %s342 = smul.addr %s341, 8
        %s343 = smul.addr %s342, 4
        %s344 = scalar_lea.vmem %s3, %s343
      $region44: #{_lambda_.6} parent=39 // pred_fallthru
        _
    $region40: #{_lambda_.6} parent=5 // pred_fallthru
      _
  $region6: #{_lambda_.6} parent=0 // loop_footer
    %s13 = sadd.s32 1, %s9
  $region7: #{_lambda_.6} parent=0 // loop_footer_branch
    %8 = sbr.rel target = $region3
  $region8: #{_lambda_.6} parent=0 // loop_exit
    _

// kernel: _lambda_.7
$region0: #{_lambda_.7}
  #allocation0 [shape = 'u32[]', space=smem, size = 0x4, offset = 0x4, fixed_abs, tag = 'smem constant byte address 0x4 - core index']
  #allocation1 [shape = 'u32[72,128]{1,0:T(1,128)}', space=vmem, size = 0x9000, scoped, tag = 'internal scratch']
  %s0 = inlined_call_operand.vmem [shape: bf16[2,64,256], index: 0, kind: input, shape index: {}]
  %s1 = inlined_call_operand.vmem [shape: bf16[256,128], index: 1, kind: input, shape index: {}]
  %s2 = inlined_call_operand.vmem [shape: f32[1,128], index: 2, kind: input, shape index: {}]
  %s3 = inlined_call_operand.vmem [shape: bf16[2,64,128], index: 3, kind: input, shape index: {}]
  %s4 = inlined_call_operand.vmem [shape: bf16[2,64,128], index: 4, kind: output, shape index: {}]
  %s5 = sld [smem:[#allocation0]]
  $region49: #{_lambda_.7} parent=0
    _
  %s7 = ssub.s32 1, %s5
  %s8 = scalar_select 0, %s7, %s5
  loop: start=0, step=1, limit=4
  $region2: #{_lambda_.7} parent=0 // loop_pre_header
    _
  $region3: #{_lambda_.7} parent=0 // loop_header
    %s10 = sphi 0, %s14
    %p11 = scmp.ge.s32.totalorder %s10, 4
    %s20 = sphi 0, %s22
    %s23 = sphi 0, %s20
    %s24 = sphi 0, %s23
    %s40 = sphi 0, %s24
    %s44 = sphi 0, %s44
    %s46 = sphi 0, %s44
    %s47 = sphi 0, %s46
    %s61 = sphi 0, %s47
    %s65 = sphi 0, %s65
    %s67 = sphi 0, %s65
    %s68 = sphi 0, %s67
    %s82 = sphi 0, %s68
    %s88 = sphi 0, %s90
    %s91 = sphi 0, %s88
    %s92 = sphi 0, %s91
    %s108 = sphi 0, %s92
    %s114 = sphi 0, %s116
    %s117 = sphi 0, %s114
    %s118 = sphi 0, %s117
    %s134 = sphi 0, %s118
  $region4: #{_lambda_.7} parent=0 // loop_header_branch
    %13 = sbr.rel (%p11) target = $region8
  $region5: #{_lambda_.7} parent=0 // loop_body
    %s15 = ssub.s32 %s10, 1
    %s16 = ssub.s32 %s10, 2
    %s17 = sadd.s32 %s10, 1
    %s18 = ssub.s32 %s10, %s17
    %p19 = scmp.eq.s32.totalorder %s18, 0
    %s21 = sadd.s32 %s20, 1
    %s22 = scalar_select %p19, %s20, %s21
    %p25 = pneg %p19
    %p26 = scmp.eq.s32.totalorder %s10, 1
    %p27 = por %p25, %p26
    %p28 = scmp.ne.s32.totalorder %s20, %s23
    %p29 = scmp.eq.s32.totalorder %s10, 0
    %p30 = por %p28, %p29
    %p31 = scmp.ne.s32.totalorder %s20, %s23
    %p32 = scmp.eq.s32.totalorder %s15, 1
    %p33 = por %p31, %p32
    %p34 = scmp.ne.s32.totalorder %s23, %s24
    %p35 = scmp.eq.s32.totalorder %s15, 0
    %p36 = por %p34, %p35
    %p37 = scmp.ne.s32.totalorder %s23, %s24
    %p38 = scmp.eq.s32.totalorder %s16, 1
    %p39 = por %p37, %p38
    %p41 = scmp.ne.s32.totalorder %s24, %s40
    %p42 = scmp.eq.s32.totalorder %s16, 0
    %p43 = por %p41, %p42
    %s45 = sadd.s32 %s44, 1
    %p48 = scmp.eq.s32.totalorder %s10, 1
    %p49 = scmp.ne.s32.totalorder %s44, %s46
    %p50 = scmp.eq.s32.totalorder %s10, 0
    %p51 = por %p49, %p50
    %p52 = scmp.ne.s32.totalorder %s44, %s46
    %p53 = scmp.eq.s32.totalorder %s15, 1
    %p54 = por %p52, %p53
    %p55 = scmp.ne.s32.totalorder %s46, %s47
    %p56 = scmp.eq.s32.totalorder %s15, 0
    %p57 = por %p55, %p56
    %p58 = scmp.ne.s32.totalorder %s46, %s47
    %p59 = scmp.eq.s32.totalorder %s16, 1
    %p60 = por %p58, %p59
    %p62 = scmp.ne.s32.totalorder %s47, %s61
    %p63 = scmp.eq.s32.totalorder %s16, 0
    %p64 = por %p62, %p63
    %s66 = sadd.s32 %s65, 1
    %p69 = scmp.eq.s32.totalorder %s10, 1
    %p70 = scmp.ne.s32.totalorder %s65, %s67
    %p71 = scmp.eq.s32.totalorder %s10, 0
    %p72 = por %p70, %p71
    %p73 = scmp.ne.s32.totalorder %s65, %s67
    %p74 = scmp.eq.s32.totalorder %s15, 1
    %p75 = por %p73, %p74
    %p76 = scmp.ne.s32.totalorder %s67, %s68
    %p77 = scmp.eq.s32.totalorder %s15, 0
    %p78 = por %p76, %p77
    %p79 = scmp.ne.s32.totalorder %s67, %s68
    %p80 = scmp.eq.s32.totalorder %s16, 1
    %p81 = por %p79, %p80
    %p83 = scmp.ne.s32.totalorder %s68, %s82
    %p84 = scmp.eq.s32.totalorder %s16, 0
    %p85 = por %p83, %p84
    %s86 = ssub.s32 %s10, %s17
    %p87 = scmp.eq.s32.totalorder %s86, 0
    %s89 = sadd.s32 %s88, 1
    %s90 = scalar_select %p87, %s88, %s89
    %p93 = pneg %p87
    %p94 = scmp.eq.s32.totalorder %s10, 1
    %p95 = por %p93, %p94
    %p96 = scmp.ne.s32.totalorder %s88, %s91
    %p97 = scmp.eq.s32.totalorder %s10, 0
    %p98 = por %p96, %p97
    %p99 = scmp.ne.s32.totalorder %s88, %s91
    %p100 = scmp.eq.s32.totalorder %s15, 1
    %p101 = por %p99, %p100
    %p102 = scmp.ne.s32.totalorder %s91, %s92
    %p103 = scmp.eq.s32.totalorder %s15, 0
    %p104 = por %p102, %p103
    %p105 = scmp.ne.s32.totalorder %s91, %s92
    %p106 = scmp.eq.s32.totalorder %s16, 1
    %p107 = por %p105, %p106
    %p109 = scmp.ne.s32.totalorder %s92, %s108
    %p110 = scmp.eq.s32.totalorder %s16, 0
    %p111 = por %p109, %p110
    %s112 = ssub.s32 %s10, %s17
    %p113 = scmp.eq.s32.totalorder %s112, 0
    %s115 = sadd.s32 %s114, 1
    %s116 = scalar_select %p113, %s114, %s115
    %p119 = pneg %p113
    %p120 = scmp.eq.s32.totalorder %s10, 1
    %p121 = por %p119, %p120
    %p122 = scmp.ne.s32.totalorder %s114, %s117
    %p123 = scmp.eq.s32.totalorder %s10, 0
    %p124 = por %p122, %p123
    %p125 = scmp.ne.s32.totalorder %s114, %s117
    %p126 = scmp.eq.s32.totalorder %s15, 1
    %p127 = por %p125, %p126
    %p128 = scmp.ne.s32.totalorder %s117, %s118
    %p129 = scmp.eq.s32.totalorder %s15, 0
    %p130 = por %p128, %p129
    %p131 = scmp.ne.s32.totalorder %s117, %s118
    %p132 = scmp.eq.s32.totalorder %s16, 1
    %p133 = por %p131, %p132
    %p135 = scmp.ne.s32.totalorder %s118, %s134
    %p136 = scmp.eq.s32.totalorder %s16, 0
    %p137 = por %p135, %p136
    %p138 = scmp.le.s32.totalorder 1, %s10
    %p139 = scmp.lt.s32.totalorder %s10, 3
    %p140 = pnand %p138, %p139
    %p141 = pneg %p140
    // Predicated region
    $region9: #{_lambda_.7} parent=5 // pred_check
      _
    $region10: #{_lambda_.7} parent=5 // pred_check_branch
      %143 = sbr.rel (%p140) target = $region12
    $region11: #{_lambda_.7} parent=5 // pred_region
      %s144 = ssub.s32 %s10, 1
      // Predicated region
      $region13: #{_lambda_.7} parent=11 // pred_check
        %p145 = pneg %p57
      $region14: #{_lambda_.7} parent=11 // pred_check_branch
        %147 = sbr.rel (%p145) target = $region16
      $region15: #{_lambda_.7} parent=11 // pred_region
        _
      $region16: #{_lambda_.7} parent=11 // pred_fallthru
        _
      // Predicated region
      $region17: #{_lambda_.7} parent=11 // pred_check
        %p148 = pneg %p78
      $region18: #{_lambda_.7} parent=11 // pred_check_branch
        %150 = sbr.rel (%p148) target = $region20
      $region19: #{_lambda_.7} parent=11 // pred_region
        _
      $region20: #{_lambda_.7} parent=11 // pred_fallthru
        _
    $region12: #{_lambda_.7} parent=5 // pred_fallthru
      _
    %p151 = scmp.lt.s32.totalorder %s10, 2
    // Predicated region
    $region21: #{_lambda_.7} parent=5 // pred_check
      %p152 = pneg %p151
    $region22: #{_lambda_.7} parent=5 // pred_check_branch
      %154 = sbr.rel (%p152) target = $region24
    $region23: #{_lambda_.7} parent=5 // pred_region
      // Predicated region
      $region25: #{_lambda_.7} parent=23 // pred_check
        %p155 = pneg %p30
      $region26: #{_lambda_.7} parent=23 // pred_check_branch
        %157 = sbr.rel (%p155) target = $region28
      $region27: #{_lambda_.7} parent=23 // pred_region
        %p158 = scmp.lt.s32.totalorder %s10, 1
        %s159 = scalar_select %p158, %s10, 1
        %s160 = smul.addr %s159, 16
        %s161 = smul.addr %s160, 4
        %s162 = scalar_lea.vmem %s0, %s161
      $region28: #{_lambda_.7} parent=23 // pred_fallthru
        _
      // Predicated region
      $region29: #{_lambda_.7} parent=23 // pred_check
        %p163 = pneg %p98
      $region30: #{_lambda_.7} parent=23 // pred_check_branch
        %165 = sbr.rel (%p163) target = $region32
      $region31: #{_lambda_.7} parent=23 // pred_region
        %p166 = scmp.lt.s32.totalorder %s10, 1
        %s167 = scalar_select %p166, %s10, 1
        %s168 = smul.addr %s167, 8
        %s169 = smul.addr %s168, 4
        %s170 = scalar_lea.vmem %s3, %s169
      $region32: #{_lambda_.7} parent=23 // pred_fallthru
        _
    $region24: #{_lambda_.7} parent=5 // pred_fallthru
      _
    %p171 = scmp.le.s32.totalorder 1, %s10
    %p172 = scmp.lt.s32.totalorder %s10, 3
    %p173 = pnand %p171, %p172
    %p174 = pneg %p173
    // Predicated region
    $region33: #{_lambda_.7} parent=5 // pred_check
      _
    $region34: #{_lambda_.7} parent=5 // pred_check_branch
      %176 = sbr.rel (%p173) target = $region36
    $region35: #{_lambda_.7} parent=5 // pred_region
      %s177 = ssub.s32 %s10, 1
      %p178 = scmp.lt.s32.totalorder %s15, 1
      %s179 = scalar_select %p178, %s15, 1
      %s180 = smul.addr %s179, 16
      %s181 = smul.addr %s180, 4
      %s182 = scalar_lea.vmem %s0, %s181
      %p183 = pneg %p36
      %p184 = pneg %p33
      %p185 = pneg %p57
      %p186 = pneg %p54
      %p187 = pneg %p78
      %p188 = pneg %p75
      %p189 = scmp.lt.s32.totalorder %s15, 1
      %s190 = scalar_select %p189, %s15, 1
      %s191 = smul.addr %s190, 8
      %s192 = smul.addr %s191, 4
      %s193 = scalar_lea.vmem %s3, %s192
      %p194 = pneg %p104
      %p195 = pneg %p101
      %p196 = pneg %p130
      %p197 = pneg %p127
      %p198 = scmp.lt.s32.totalorder %s15, 1
      %s199 = scalar_select %p198, %s15, 1
      %s200 = smul.addr %s199, 8
      %s201 = smul.addr %s200, 4
      %s202 = scalar_lea.vmem %s4, %s201
      %p203 = scmp.lt.s32.totalorder %s15, 1
      %s204 = scalar_select %p203, %s15, 1
      %s205 = smul.addr %s204, 16
      %s206 = smul.addr %s205, 4
      %s207 = scalar_lea.vmem %s0, %s206
      %p208 = scmp.lt.s32.totalorder %s15, 1
      %s209 = scalar_select %p208, %s15, 1
      %s210 = smul.addr %s209, 8
      %s211 = smul.addr %s210, 4
      %s212 = scalar_lea.vmem %s3, %s211
      %p213 = scmp.lt.s32.totalorder %s15, 1
      %s214 = scalar_select %p213, %s15, 1
      %s215 = smul.addr %s214, 8
      %s216 = smul.addr %s215, 4
      %s217 = scalar_lea.vmem %s4, %s216
      %v218 = vld [vmem:[%s207] sm:$0xff]
      %v219 = vld [vmem:[%s207 + $0x8] sm:$0xff]
      %v220 = vld [vmem:[%s207 + $0x10] sm:$0xff]
      %v221 = vld [vmem:[%s207 + $0x18] sm:$0xff]
      %v222 = vld [vmem:[%s207 + $0x20] sm:$0xff]
      %v223 = vld [vmem:[%s207 + $0x28] sm:$0xff]
      %v224 = vld [vmem:[%s207 + $0x30] sm:$0xff]
      %v225 = vld [vmem:[%s207 + $0x38] sm:$0xff]
      %v226 = vld [vmem:[%s1] sm:$0xf]
      %v227 = vld [vmem:[%s1 + $0x4] sm:$0xf]
      %v228 = vld [vmem:[%s1 + $0x8] sm:$0xf]
      %v229 = vld [vmem:[%s1 + $0xc] sm:$0xf]
      %v230 = vld [vmem:[%s1 + $0x10] sm:$0xf]
      %v231 = vld [vmem:[%s1 + $0x14] sm:$0xf]
      %v232 = vld [vmem:[%s1 + $0x18] sm:$0xf]
      %v233 = vld [vmem:[%s1 + $0x1c] sm:$0xf]
      %v234 = vld [vmem:[%s1 + $0x20] sm:$0xf]
      %v235 = vld [vmem:[%s1 + $0x24] sm:$0xf]
      %v236 = vld [vmem:[%s1 + $0x28] sm:$0xf]
      %v237 = vld [vmem:[%s1 + $0x2c] sm:$0xf]
      %v238 = vld [vmem:[%s1 + $0x30] sm:$0xf]
      %v239 = vld [vmem:[%s1 + $0x34] sm:$0xf]
      %v240 = vld [vmem:[%s1 + $0x38] sm:$0xf]
      %v241 = vld [vmem:[%s1 + $0x3c] sm:$0xf]
      %v242 = vld [vmem:[%s1 + $0x40] sm:$0xf]
      %v243 = vld [vmem:[%s1 + $0x44] sm:$0xf]
      %v244 = vld [vmem:[%s1 + $0x48] sm:$0xf]
      %v245 = vld [vmem:[%s1 + $0x4c] sm:$0xf]
      %v246 = vld [vmem:[%s1 + $0x50] sm:$0xf]
      %v247 = vld [vmem:[%s1 + $0x54] sm:$0xf]
      %v248 = vld [vmem:[%s1 + $0x58] sm:$0xf]
      %v249 = vld [vmem:[%s1 + $0x5c] sm:$0xf]
      %v250 = vld [vmem:[%s1 + $0x60] sm:$0xf]
      %v251 = vld [vmem:[%s1 + $0x64] sm:$0xf]
      %v252 = vld [vmem:[%s1 + $0x68] sm:$0xf]
      %v253 = vld [vmem:[%s1 + $0x6c] sm:$0xf]
      %v254 = vld [vmem:[%s1 + $0x70] sm:$0xf]
      %v255 = vld [vmem:[%s1 + $0x74] sm:$0xf]
      %v256 = vld [vmem:[%s1 + $0x78] sm:$0xf]
      %v257 = vld [vmem:[%s1 + $0x7c] sm:$0xf]
      %v258 = vld [vmem:[%s2] sm:$0x1]
      %v260 = vperm.slane %v258, 0
      %v270 = vunpack.c.l.b16 %v218
      %v271 = vunpack.c.h.b16 %v218
      %v272 = vunpack.c.l.b16 %v219
      %v273 = vunpack.c.h.b16 %v219
      %v274 = vunpack.c.l.b16 %v220
      %v275 = vunpack.c.h.b16 %v220
      %v276 = vunpack.c.l.b16 %v221
      %v277 = vunpack.c.h.b16 %v221
      %v278 = vunpack.c.l.b16 %v222
      %v279 = vunpack.c.h.b16 %v222
      %v280 = vunpack.c.l.b16 %v223
      %v281 = vunpack.c.h.b16 %v223
      %v282 = vunpack.c.l.b16 %v224
      %v283 = vunpack.c.h.b16 %v224
      %v284 = vunpack.c.l.b16 %v225
      %v285 = vunpack.c.h.b16 %v225
      %v286 = vpack.c.b16 %v272, %v270
      %v287 = vpack.c.b16 %v273, %v271
      %v288 = vpack.c.b16 %v276, %v274
      %v289 = vpack.c.b16 %v277, %v275
      %v290 = vpack.c.b16 %v280, %v278
      %v291 = vpack.c.b16 %v281, %v279
      %v292 = vpack.c.b16 %v284, %v282
      %v293 = vpack.c.b16 %v285, %v283
      %v334 = vunpack.c.l.b16 %v226
      %v335 = vunpack.c.l.b16 %v227
      %v336 = vunpack.c.l.b16 %v228
      %v337 = vunpack.c.l.b16 %v229
      %v338 = vunpack.c.l.b16 %v230
      %v339 = vunpack.c.l.b16 %v231
      %v340 = vunpack.c.l.b16 %v232
      %v341 = vunpack.c.l.b16 %v233
      %v342 = vunpack.c.l.b16 %v234
      %v343 = vunpack.c.l.b16 %v235
      %v344 = vunpack.c.l.b16 %v236
      %v345 = vunpack.c.l.b16 %v237
      %v346 = vunpack.c.l.b16 %v238
      %v347 = vunpack.c.l.b16 %v239
      %v348 = vunpack.c.l.b16 %v240
      %v349 = vunpack.c.l.b16 %v241
      %v350 = vunpack.c.l.b16 %v242
      %v351 = vunpack.c.l.b16 %v243
      %v352 = vunpack.c.l.b16 %v244
      %v353 = vunpack.c.l.b16 %v245
      %v354 = vunpack.c.l.b16 %v246
      %v355 = vunpack.c.l.b16 %v247
      %v356 = vunpack.c.l.b16 %v248
      %v357 = vunpack.c.l.b16 %v249
      %v358 = vunpack.c.l.b16 %v250
      %v359 = vunpack.c.l.b16 %v251
      %v360 = vunpack.c.l.b16 %v252
      %v361 = vunpack.c.l.b16 %v253
      %v362 = vunpack.c.l.b16 %v254
      %v363 = vunpack.c.l.b16 %v255
      %v364 = vunpack.c.l.b16 %v256
      %v365 = vunpack.c.l.b16 %v257
      %v366 = vpack.c.b16 %v335, %v334
      %v367 = vpack.c.b16 %v337, %v336
      %v368 = vpack.c.b16 %v339, %v338
      %v369 = vpack.c.b16 %v341, %v340
      %v370 = vpack.c.b16 %v343, %v342
      %v371 = vpack.c.b16 %v345, %v344
      %v372 = vpack.c.b16 %v347, %v346
      %v373 = vpack.c.b16 %v349, %v348
      %v374 = vpack.c.b16 %v351, %v350
      %v375 = vpack.c.b16 %v353, %v352
      %v376 = vpack.c.b16 %v355, %v354
      %v377 = vpack.c.b16 %v357, %v356
      %v378 = vpack.c.b16 %v359, %v358
      %v379 = vpack.c.b16 %v361, %v360
      %v380 = vpack.c.b16 %v363, %v362
      %v381 = vpack.c.b16 %v365, %v364
      %398 = vmatpush.bf16.msra.mxu0 %v373
      %399 = vmatpush.bf16.msra.mxu0 %v372
      %400 = vmatpush.bf16.msra.mxu0 %v371
      %401 = vmatpush.bf16.msra.mxu0 %v370
      %402 = vmatpush.bf16.msra.mxu0 %v369
      %403 = vmatpush.bf16.msra.mxu0 %v368
      %404 = vmatpush.bf16.msra.mxu0 %v367
      %405 = vmatpush.bf16.msra.mxu0 %v366
      %406 = vmatmul.bf16.gmra.mxu0 %v286
      %v407 = vpop.f32.mrf.mxu0
      %v408 = vadd.f32 %v260, %v407
      %v409 = vpop.f32.mrf.mxu0
      %v410 = vadd.f32 %v260, %v409
      %411 = vmatmul.bf16.gmra.mxu0 %v288
      %v412 = vpop.f32.mrf.mxu0
      %v413 = vadd.f32 %v260, %v412
      %v414 = vpop.f32.mrf.mxu0
      %v415 = vadd.f32 %v260, %v414
      %416 = vmatmul.bf16.gmra.mxu0 %v290
      %v417 = vpop.f32.mrf.mxu0
      %v418 = vadd.f32 %v260, %v417
      %v419 = vpop.f32.mrf.mxu0
      %v420 = vadd.f32 %v260, %v419
      %421 = vmatmul.bf16.gmra.mxu0 %v292
      %v422 = vpop.f32.mrf.mxu0
      %v423 = vadd.f32 %v260, %v422
      %v424 = vpop.f32.mrf.mxu0
      %v425 = vadd.f32 %v260, %v424
      %426 = vdwg.mxu0
      %427 = vmatpush.bf16.msra.mxu0 %v381
      %428 = vmatpush.bf16.msra.mxu0 %v380
      %429 = vmatpush.bf16.msra.mxu0 %v379
      %430 = vmatpush.bf16.msra.mxu0 %v378
      %431 = vmatpush.bf16.msra.mxu0 %v377
      %432 = vmatpush.bf16.msra.mxu0 %v376
      %433 = vmatpush.bf16.msra.mxu0 %v375
      %434 = vmatpush.bf16.msra.mxu0 %v374
      %435 = vmatmul.bf16.gmra.mxu0 %v287
      %v436 = vpop.f32.mrf.mxu0
      %v437 = vadd.f32 %v408, %v436
      %v438 = vpop.f32.mrf.mxu0
      %v439 = vadd.f32 %v410, %v438
      %440 = vmatmul.bf16.gmra.mxu0 %v289
      %v441 = vpop.f32.mrf.mxu0
      %v442 = vadd.f32 %v413, %v441
      %v443 = vpop.f32.mrf.mxu0
      %v444 = vadd.f32 %v415, %v443
      %445 = vmatmul.bf16.gmra.mxu0 %v291
      %v446 = vpop.f32.mrf.mxu0
      %v447 = vadd.f32 %v418, %v446
      %v448 = vpop.f32.mrf.mxu0
      %v449 = vadd.f32 %v420, %v448
      %450 = vmatmul.bf16.gmra.mxu0 %v293
      %v451 = vpop.f32.mrf.mxu0
      %v452 = vadd.f32 %v423, %v451
      %v453 = vpop.f32.mrf.mxu0
      %v454 = vadd.f32 %v425, %v453
      %455 = vdwg.mxu0
      %v456 = vld [vmem:[%s212] sm:$0xf]
      %v457 = vld [vmem:[%s212 + $0x4] sm:$0xf]
      %v458 = vld [vmem:[%s212 + $0x8] sm:$0xf]
      %v459 = vld [vmem:[%s212 + $0xc] sm:$0xf]
      %v460 = vld [vmem:[%s212 + $0x10] sm:$0xf]
      %v461 = vld [vmem:[%s212 + $0x14] sm:$0xf]
      %v462 = vld [vmem:[%s212 + $0x18] sm:$0xf]
      %v463 = vld [vmem:[%s212 + $0x1c] sm:$0xf]
      %v464 = vunpack.c.l.bf16 %v456
      %v465 = vunpack.c.l.bf16 %v457
      %v466 = vunpack.c.l.bf16 %v458
      %v467 = vunpack.c.l.bf16 %v459
      %v468 = vunpack.c.l.bf16 %v460
      %v469 = vunpack.c.l.bf16 %v461
      %v470 = vunpack.c.l.bf16 %v462
      %v471 = vunpack.c.l.bf16 %v463
      %v472 = vadd.f32 %v437, %v464
      %v473 = vadd.f32 %v439, %v465
      %v474 = vadd.f32 %v442, %v466
      %v475 = vadd.f32 %v444, %v467
      %v476 = vadd.f32 %v447, %v468
      %v477 = vadd.f32 %v449, %v469
      %v478 = vadd.f32 %v452, %v470
      %v479 = vadd.f32 %v454, %v471
      %v480 = vmax.f32 %v472, 0.0
      %v481 = vmax.f32 %v473, 0.0
      %v482 = vmax.f32 %v474, 0.0
      %v483 = vmax.f32 %v475, 0.0
      %v484 = vmax.f32 %v476, 0.0
      %v485 = vmax.f32 %v477, 0.0
      %v486 = vmax.f32 %v478, 0.0
      %v487 = vmax.f32 %v479, 0.0
      %v488 = vpack.c.bf16 %v480, %v480
      %v489 = vpack.c.bf16 %v481, %v481
      %v490 = vpack.c.bf16 %v482, %v482
      %v491 = vpack.c.bf16 %v483, %v483
      %v492 = vpack.c.bf16 %v484, %v484
      %v493 = vpack.c.bf16 %v485, %v485
      %v494 = vpack.c.bf16 %v486, %v486
      %v495 = vpack.c.bf16 %v487, %v487
      %496 = vst [vmem:[%s217] sm:$0xf] %v488
      %497 = vst [vmem:[%s217 + $0x4] sm:$0xf] %v489
      %498 = vst [vmem:[%s217 + $0x8] sm:$0xf] %v490
      %499 = vst [vmem:[%s217 + $0xc] sm:$0xf] %v491
      %500 = vst [vmem:[%s217 + $0x10] sm:$0xf] %v492
      %501 = vst [vmem:[%s217 + $0x14] sm:$0xf] %v493
      %502 = vst [vmem:[%s217 + $0x18] sm:$0xf] %v494
      %503 = vst [vmem:[%s217 + $0x1c] sm:$0xf] %v495
      %p504 = scmp.lt.s32.totalorder %s15, 1
      %s505 = scalar_select %p504, %s15, 1
      %s506 = smul.addr %s505, 8
      %s507 = smul.addr %s506, 4
      %s508 = scalar_lea.vmem %s4, %s507
      // Predicated region
      $region37: #{_lambda_.7} parent=35 // pred_check
        %p509 = pneg %p127
      $region38: #{_lambda_.7} parent=35 // pred_check_branch
        %511 = sbr.rel (%p509) target = $region40
      $region39: #{_lambda_.7} parent=35 // pred_region
        _
      $region40: #{_lambda_.7} parent=35 // pred_fallthru
        _
    $region36: #{_lambda_.7} parent=5 // pred_fallthru
      _
    %p512 = scmp.le.s32.totalorder 2, %s10
    // Predicated region
    $region41: #{_lambda_.7} parent=5 // pred_check
      %p513 = pneg %p512
    $region42: #{_lambda_.7} parent=5 // pred_check_branch
      %515 = sbr.rel (%p513) target = $region44
    $region43: #{_lambda_.7} parent=5 // pred_region
      %s516 = ssub.s32 %s10, 2
      // Predicated region
      $region45: #{_lambda_.7} parent=43 // pred_check
        %p517 = pneg %p133
      $region46: #{_lambda_.7} parent=43 // pred_check_branch
        %519 = sbr.rel (%p517) target = $region48
      $region47: #{_lambda_.7} parent=43 // pred_region
        %p520 = scmp.lt.s32.totalorder %s16, 1
        %s521 = scalar_select %p520, %s16, 1
        %s522 = smul.addr %s521, 8
        %s523 = smul.addr %s522, 4
        %s524 = scalar_lea.vmem %s4, %s523
      $region48: #{_lambda_.7} parent=43 // pred_fallthru
        _
    $region44: #{_lambda_.7} parent=5 // pred_fallthru
      _
  $region6: #{_lambda_.7} parent=0 // loop_footer
    %s14 = sadd.s32 1, %s10
  $region7: #{_lambda_.7} parent=0 // loop_footer_branch
    %9 = sbr.rel target = $region3
  $region8: #{_lambda_.7} parent=0 // loop_exit
    _

// kernel: _lambda_.8
$region0: #{_lambda_.8}
  #allocation0 [shape = 'u32[]', space=smem, size = 0x4, offset = 0x4, fixed_abs, tag = 'smem constant byte address 0x4 - core index']
  #allocation1 [shape = 'u32[72,128]{1,0:T(1,128)}', space=vmem, size = 0x9000, scoped, tag = 'internal scratch']
  %s0 = inlined_call_operand.vmem [shape: bf16[2,64,256], index: 0, kind: input, shape index: {}]
  %s1 = inlined_call_operand.vmem [shape: bf16[256,128], index: 1, kind: input, shape index: {}]
  %s2 = inlined_call_operand.vmem [shape: f32[1,128], index: 2, kind: input, shape index: {}]
  %s3 = inlined_call_operand.vmem [shape: bf16[2,64,128], index: 3, kind: output, shape index: {}]
  %s4 = sld [smem:[#allocation0]]
  $region45: #{_lambda_.8} parent=0
    _
  %s6 = ssub.s32 1, %s4
  %s7 = scalar_select 0, %s6, %s4
  loop: start=0, step=1, limit=4
  $region2: #{_lambda_.8} parent=0 // loop_pre_header
    _
  $region3: #{_lambda_.8} parent=0 // loop_header
    %s9 = sphi 0, %s13
    %p10 = scmp.ge.s32.totalorder %s9, 4
    %s19 = sphi 0, %s21
    %s22 = sphi 0, %s19
    %s23 = sphi 0, %s22
    %s39 = sphi 0, %s23
    %s43 = sphi 0, %s43
    %s45 = sphi 0, %s43
    %s46 = sphi 0, %s45
    %s60 = sphi 0, %s46
    %s64 = sphi 0, %s64
    %s66 = sphi 0, %s64
    %s67 = sphi 0, %s66
    %s81 = sphi 0, %s67
    %s87 = sphi 0, %s89
    %s90 = sphi 0, %s87
    %s91 = sphi 0, %s90
    %s107 = sphi 0, %s91
  $region4: #{_lambda_.8} parent=0 // loop_header_branch
    %12 = sbr.rel (%p10) target = $region8
  $region5: #{_lambda_.8} parent=0 // loop_body
    %s14 = ssub.s32 %s9, 1
    %s15 = ssub.s32 %s9, 2
    %s16 = sadd.s32 %s9, 1
    %s17 = ssub.s32 %s9, %s16
    %p18 = scmp.eq.s32.totalorder %s17, 0
    %s20 = sadd.s32 %s19, 1
    %s21 = scalar_select %p18, %s19, %s20
    %p24 = pneg %p18
    %p25 = scmp.eq.s32.totalorder %s9, 1
    %p26 = por %p24, %p25
    %p27 = scmp.ne.s32.totalorder %s19, %s22
    %p28 = scmp.eq.s32.totalorder %s9, 0
    %p29 = por %p27, %p28
    %p30 = scmp.ne.s32.totalorder %s19, %s22
    %p31 = scmp.eq.s32.totalorder %s14, 1
    %p32 = por %p30, %p31
    %p33 = scmp.ne.s32.totalorder %s22, %s23
    %p34 = scmp.eq.s32.totalorder %s14, 0
    %p35 = por %p33, %p34
    %p36 = scmp.ne.s32.totalorder %s22, %s23
    %p37 = scmp.eq.s32.totalorder %s15, 1
    %p38 = por %p36, %p37
    %p40 = scmp.ne.s32.totalorder %s23, %s39
    %p41 = scmp.eq.s32.totalorder %s15, 0
    %p42 = por %p40, %p41
    %s44 = sadd.s32 %s43, 1
    %p47 = scmp.eq.s32.totalorder %s9, 1
    %p48 = scmp.ne.s32.totalorder %s43, %s45
    %p49 = scmp.eq.s32.totalorder %s9, 0
    %p50 = por %p48, %p49
    %p51 = scmp.ne.s32.totalorder %s43, %s45
    %p52 = scmp.eq.s32.totalorder %s14, 1
    %p53 = por %p51, %p52
    %p54 = scmp.ne.s32.totalorder %s45, %s46
    %p55 = scmp.eq.s32.totalorder %s14, 0
    %p56 = por %p54, %p55
    %p57 = scmp.ne.s32.totalorder %s45, %s46
    %p58 = scmp.eq.s32.totalorder %s15, 1
    %p59 = por %p57, %p58
    %p61 = scmp.ne.s32.totalorder %s46, %s60
    %p62 = scmp.eq.s32.totalorder %s15, 0
    %p63 = por %p61, %p62
    %s65 = sadd.s32 %s64, 1
    %p68 = scmp.eq.s32.totalorder %s9, 1
    %p69 = scmp.ne.s32.totalorder %s64, %s66
    %p70 = scmp.eq.s32.totalorder %s9, 0
    %p71 = por %p69, %p70
    %p72 = scmp.ne.s32.totalorder %s64, %s66
    %p73 = scmp.eq.s32.totalorder %s14, 1
    %p74 = por %p72, %p73
    %p75 = scmp.ne.s32.totalorder %s66, %s67
    %p76 = scmp.eq.s32.totalorder %s14, 0
    %p77 = por %p75, %p76
    %p78 = scmp.ne.s32.totalorder %s66, %s67
    %p79 = scmp.eq.s32.totalorder %s15, 1
    %p80 = por %p78, %p79
    %p82 = scmp.ne.s32.totalorder %s67, %s81
    %p83 = scmp.eq.s32.totalorder %s15, 0
    %p84 = por %p82, %p83
    %s85 = ssub.s32 %s9, %s16
    %p86 = scmp.eq.s32.totalorder %s85, 0
    %s88 = sadd.s32 %s87, 1
    %s89 = scalar_select %p86, %s87, %s88
    %p92 = pneg %p86
    %p93 = scmp.eq.s32.totalorder %s9, 1
    %p94 = por %p92, %p93
    %p95 = scmp.ne.s32.totalorder %s87, %s90
    %p96 = scmp.eq.s32.totalorder %s9, 0
    %p97 = por %p95, %p96
    %p98 = scmp.ne.s32.totalorder %s87, %s90
    %p99 = scmp.eq.s32.totalorder %s14, 1
    %p100 = por %p98, %p99
    %p101 = scmp.ne.s32.totalorder %s90, %s91
    %p102 = scmp.eq.s32.totalorder %s14, 0
    %p103 = por %p101, %p102
    %p104 = scmp.ne.s32.totalorder %s90, %s91
    %p105 = scmp.eq.s32.totalorder %s15, 1
    %p106 = por %p104, %p105
    %p108 = scmp.ne.s32.totalorder %s91, %s107
    %p109 = scmp.eq.s32.totalorder %s15, 0
    %p110 = por %p108, %p109
    %p111 = scmp.le.s32.totalorder 1, %s9
    %p112 = scmp.lt.s32.totalorder %s9, 3
    %p113 = pnand %p111, %p112
    %p114 = pneg %p113
    // Predicated region
    $region9: #{_lambda_.8} parent=5 // pred_check
      _
    $region10: #{_lambda_.8} parent=5 // pred_check_branch
      %116 = sbr.rel (%p113) target = $region12
    $region11: #{_lambda_.8} parent=5 // pred_region
      %s117 = ssub.s32 %s9, 1
      // Predicated region
      $region13: #{_lambda_.8} parent=11 // pred_check
        %p118 = pneg %p56
      $region14: #{_lambda_.8} parent=11 // pred_check_branch
        %120 = sbr.rel (%p118) target = $region16
      $region15: #{_lambda_.8} parent=11 // pred_region
        _
      $region16: #{_lambda_.8} parent=11 // pred_fallthru
        _
      // Predicated region
      $region17: #{_lambda_.8} parent=11 // pred_check
        %p121 = pneg %p77
      $region18: #{_lambda_.8} parent=11 // pred_check_branch
        %123 = sbr.rel (%p121) target = $region20
      $region19: #{_lambda_.8} parent=11 // pred_region
        _
      $region20: #{_lambda_.8} parent=11 // pred_fallthru
        _
    $region12: #{_lambda_.8} parent=5 // pred_fallthru
      _
    %p124 = scmp.lt.s32.totalorder %s9, 2
    // Predicated region
    $region21: #{_lambda_.8} parent=5 // pred_check
      %p125 = pneg %p124
    $region22: #{_lambda_.8} parent=5 // pred_check_branch
      %127 = sbr.rel (%p125) target = $region24
    $region23: #{_lambda_.8} parent=5 // pred_region
      // Predicated region
      $region25: #{_lambda_.8} parent=23 // pred_check
        %p128 = pneg %p29
      $region26: #{_lambda_.8} parent=23 // pred_check_branch
        %130 = sbr.rel (%p128) target = $region28
      $region27: #{_lambda_.8} parent=23 // pred_region
        %p131 = scmp.lt.s32.totalorder %s9, 1
        %s132 = scalar_select %p131, %s9, 1
        %s133 = smul.addr %s132, 16
        %s134 = smul.addr %s133, 4
        %s135 = scalar_lea.vmem %s0, %s134
      $region28: #{_lambda_.8} parent=23 // pred_fallthru
        _
    $region24: #{_lambda_.8} parent=5 // pred_fallthru
      _
    %p136 = scmp.le.s32.totalorder 1, %s9
    %p137 = scmp.lt.s32.totalorder %s9, 3
    %p138 = pnand %p136, %p137
    %p139 = pneg %p138
    // Predicated region
    $region29: #{_lambda_.8} parent=5 // pred_check
      _
    $region30: #{_lambda_.8} parent=5 // pred_check_branch
      %141 = sbr.rel (%p138) target = $region32
    $region31: #{_lambda_.8} parent=5 // pred_region
      %s142 = ssub.s32 %s9, 1
      %p143 = scmp.lt.s32.totalorder %s14, 1
      %s144 = scalar_select %p143, %s14, 1
      %s145 = smul.addr %s144, 16
      %s146 = smul.addr %s145, 4
      %s147 = scalar_lea.vmem %s0, %s146
      %p148 = pneg %p35
      %p149 = pneg %p32
      %p150 = pneg %p56
      %p151 = pneg %p53
      %p152 = pneg %p77
      %p153 = pneg %p74
      %p154 = pneg %p103
      %p155 = pneg %p100
      %p156 = scmp.lt.s32.totalorder %s14, 1
      %s157 = scalar_select %p156, %s14, 1
      %s158 = smul.addr %s157, 8
      %s159 = smul.addr %s158, 4
      %s160 = scalar_lea.vmem %s3, %s159
      %p161 = scmp.lt.s32.totalorder %s14, 1
      %s162 = scalar_select %p161, %s14, 1
      %s163 = smul.addr %s162, 16
      %s164 = smul.addr %s163, 4
      %s165 = scalar_lea.vmem %s0, %s164
      %p166 = scmp.lt.s32.totalorder %s14, 1
      %s167 = scalar_select %p166, %s14, 1
      %s168 = smul.addr %s167, 8
      %s169 = smul.addr %s168, 4
      %s170 = scalar_lea.vmem %s3, %s169
      %v171 = vld [vmem:[%s165] sm:$0xff]
      %v172 = vld [vmem:[%s165 + $0x8] sm:$0xff]
      %v173 = vld [vmem:[%s165 + $0x10] sm:$0xff]
      %v174 = vld [vmem:[%s165 + $0x18] sm:$0xff]
      %v175 = vld [vmem:[%s165 + $0x20] sm:$0xff]
      %v176 = vld [vmem:[%s165 + $0x28] sm:$0xff]
      %v177 = vld [vmem:[%s165 + $0x30] sm:$0xff]
      %v178 = vld [vmem:[%s165 + $0x38] sm:$0xff]
      %v179 = vld [vmem:[%s1] sm:$0xf]
      %v180 = vld [vmem:[%s1 + $0x4] sm:$0xf]
      %v181 = vld [vmem:[%s1 + $0x8] sm:$0xf]
      %v182 = vld [vmem:[%s1 + $0xc] sm:$0xf]
      %v183 = vld [vmem:[%s1 + $0x10] sm:$0xf]
      %v184 = vld [vmem:[%s1 + $0x14] sm:$0xf]
      %v185 = vld [vmem:[%s1 + $0x18] sm:$0xf]
      %v186 = vld [vmem:[%s1 + $0x1c] sm:$0xf]
      %v187 = vld [vmem:[%s1 + $0x20] sm:$0xf]
      %v188 = vld [vmem:[%s1 + $0x24] sm:$0xf]
      %v189 = vld [vmem:[%s1 + $0x28] sm:$0xf]
      %v190 = vld [vmem:[%s1 + $0x2c] sm:$0xf]
      %v191 = vld [vmem:[%s1 + $0x30] sm:$0xf]
      %v192 = vld [vmem:[%s1 + $0x34] sm:$0xf]
      %v193 = vld [vmem:[%s1 + $0x38] sm:$0xf]
      %v194 = vld [vmem:[%s1 + $0x3c] sm:$0xf]
      %v195 = vld [vmem:[%s1 + $0x40] sm:$0xf]
      %v196 = vld [vmem:[%s1 + $0x44] sm:$0xf]
      %v197 = vld [vmem:[%s1 + $0x48] sm:$0xf]
      %v198 = vld [vmem:[%s1 + $0x4c] sm:$0xf]
      %v199 = vld [vmem:[%s1 + $0x50] sm:$0xf]
      %v200 = vld [vmem:[%s1 + $0x54] sm:$0xf]
      %v201 = vld [vmem:[%s1 + $0x58] sm:$0xf]
      %v202 = vld [vmem:[%s1 + $0x5c] sm:$0xf]
      %v203 = vld [vmem:[%s1 + $0x60] sm:$0xf]
      %v204 = vld [vmem:[%s1 + $0x64] sm:$0xf]
      %v205 = vld [vmem:[%s1 + $0x68] sm:$0xf]
      %v206 = vld [vmem:[%s1 + $0x6c] sm:$0xf]
      %v207 = vld [vmem:[%s1 + $0x70] sm:$0xf]
      %v208 = vld [vmem:[%s1 + $0x74] sm:$0xf]
      %v209 = vld [vmem:[%s1 + $0x78] sm:$0xf]
      %v210 = vld [vmem:[%s1 + $0x7c] sm:$0xf]
      %v211 = vld [vmem:[%s2] sm:$0x1]
      %v213 = vperm.slane %v211, 0
      %v223 = vunpack.c.l.b16 %v171
      %v224 = vunpack.c.h.b16 %v171
      %v225 = vunpack.c.l.b16 %v172
      %v226 = vunpack.c.h.b16 %v172
      %v227 = vunpack.c.l.b16 %v173
      %v228 = vunpack.c.h.b16 %v173
      %v229 = vunpack.c.l.b16 %v174
      %v230 = vunpack.c.h.b16 %v174
      %v231 = vunpack.c.l.b16 %v175
      %v232 = vunpack.c.h.b16 %v175
      %v233 = vunpack.c.l.b16 %v176
      %v234 = vunpack.c.h.b16 %v176
      %v235 = vunpack.c.l.b16 %v177
      %v236 = vunpack.c.h.b16 %v177
      %v237 = vunpack.c.l.b16 %v178
      %v238 = vunpack.c.h.b16 %v178
      %v239 = vpack.c.b16 %v225, %v223
      %v240 = vpack.c.b16 %v226, %v224
      %v241 = vpack.c.b16 %v229, %v227
      %v242 = vpack.c.b16 %v230, %v228
      %v243 = vpack.c.b16 %v233, %v231
      %v244 = vpack.c.b16 %v234, %v232
      %v245 = vpack.c.b16 %v237, %v235
      %v246 = vpack.c.b16 %v238, %v236
      %v287 = vunpack.c.l.b16 %v179
      %v288 = vunpack.c.l.b16 %v180
      %v289 = vunpack.c.l.b16 %v181
      %v290 = vunpack.c.l.b16 %v182
      %v291 = vunpack.c.l.b16 %v183
      %v292 = vunpack.c.l.b16 %v184
      %v293 = vunpack.c.l.b16 %v185
      %v294 = vunpack.c.l.b16 %v186
      %v295 = vunpack.c.l.b16 %v187
      %v296 = vunpack.c.l.b16 %v188
      %v297 = vunpack.c.l.b16 %v189
      %v298 = vunpack.c.l.b16 %v190
      %v299 = vunpack.c.l.b16 %v191
      %v300 = vunpack.c.l.b16 %v192
      %v301 = vunpack.c.l.b16 %v193
      %v302 = vunpack.c.l.b16 %v194
      %v303 = vunpack.c.l.b16 %v195
      %v304 = vunpack.c.l.b16 %v196
      %v305 = vunpack.c.l.b16 %v197
      %v306 = vunpack.c.l.b16 %v198
      %v307 = vunpack.c.l.b16 %v199
      %v308 = vunpack.c.l.b16 %v200
      %v309 = vunpack.c.l.b16 %v201
      %v310 = vunpack.c.l.b16 %v202
      %v311 = vunpack.c.l.b16 %v203
      %v312 = vunpack.c.l.b16 %v204
      %v313 = vunpack.c.l.b16 %v205
      %v314 = vunpack.c.l.b16 %v206
      %v315 = vunpack.c.l.b16 %v207
      %v316 = vunpack.c.l.b16 %v208
      %v317 = vunpack.c.l.b16 %v209
      %v318 = vunpack.c.l.b16 %v210
      %v319 = vpack.c.b16 %v288, %v287
      %v320 = vpack.c.b16 %v290, %v289
      %v321 = vpack.c.b16 %v292, %v291
      %v322 = vpack.c.b16 %v294, %v293
      %v323 = vpack.c.b16 %v296, %v295
      %v324 = vpack.c.b16 %v298, %v297
      %v325 = vpack.c.b16 %v300, %v299
      %v326 = vpack.c.b16 %v302, %v301
      %v327 = vpack.c.b16 %v304, %v303
      %v328 = vpack.c.b16 %v306, %v305
      %v329 = vpack.c.b16 %v308, %v307
      %v330 = vpack.c.b16 %v310, %v309
      %v331 = vpack.c.b16 %v312, %v311
      %v332 = vpack.c.b16 %v314, %v313
      %v333 = vpack.c.b16 %v316, %v315
      %v334 = vpack.c.b16 %v318, %v317
      %351 = vmatpush.bf16.msra.mxu0 %v326
      %352 = vmatpush.bf16.msra.mxu0 %v325
      %353 = vmatpush.bf16.msra.mxu0 %v324
      %354 = vmatpush.bf16.msra.mxu0 %v323
      %355 = vmatpush.bf16.msra.mxu0 %v322
      %356 = vmatpush.bf16.msra.mxu0 %v321
      %357 = vmatpush.bf16.msra.mxu0 %v320
      %358 = vmatpush.bf16.msra.mxu0 %v319
      %359 = vmatmul.bf16.gmra.mxu0 %v239
      %v360 = vpop.f32.mrf.mxu0
      %v361 = vadd.f32 %v213, %v360
      %v362 = vpop.f32.mrf.mxu0
      %v363 = vadd.f32 %v213, %v362
      %364 = vmatmul.bf16.gmra.mxu0 %v241
      %v365 = vpop.f32.mrf.mxu0
      %v366 = vadd.f32 %v213, %v365
      %v367 = vpop.f32.mrf.mxu0
      %v368 = vadd.f32 %v213, %v367
      %369 = vmatmul.bf16.gmra.mxu0 %v243
      %v370 = vpop.f32.mrf.mxu0
      %v371 = vadd.f32 %v213, %v370
      %v372 = vpop.f32.mrf.mxu0
      %v373 = vadd.f32 %v213, %v372
      %374 = vmatmul.bf16.gmra.mxu0 %v245
      %v375 = vpop.f32.mrf.mxu0
      %v376 = vadd.f32 %v213, %v375
      %v377 = vpop.f32.mrf.mxu0
      %v378 = vadd.f32 %v213, %v377
      %379 = vdwg.mxu0
      %380 = vmatpush.bf16.msra.mxu0 %v334
      %381 = vmatpush.bf16.msra.mxu0 %v333
      %382 = vmatpush.bf16.msra.mxu0 %v332
      %383 = vmatpush.bf16.msra.mxu0 %v331
      %384 = vmatpush.bf16.msra.mxu0 %v330
      %385 = vmatpush.bf16.msra.mxu0 %v329
      %386 = vmatpush.bf16.msra.mxu0 %v328
      %387 = vmatpush.bf16.msra.mxu0 %v327
      %388 = vmatmul.bf16.gmra.mxu0 %v240
      %v389 = vpop.f32.mrf.mxu0
      %v390 = vadd.f32 %v361, %v389
      %v391 = vpop.f32.mrf.mxu0
      %v392 = vadd.f32 %v363, %v391
      %393 = vmatmul.bf16.gmra.mxu0 %v242
      %v394 = vpop.f32.mrf.mxu0
      %v395 = vadd.f32 %v366, %v394
      %v396 = vpop.f32.mrf.mxu0
      %v397 = vadd.f32 %v368, %v396
      %398 = vmatmul.bf16.gmra.mxu0 %v244
      %v399 = vpop.f32.mrf.mxu0
      %v400 = vadd.f32 %v371, %v399
      %v401 = vpop.f32.mrf.mxu0
      %v402 = vadd.f32 %v373, %v401
      %403 = vmatmul.bf16.gmra.mxu0 %v246
      %v404 = vpop.f32.mrf.mxu0
      %v405 = vadd.f32 %v376, %v404
      %v406 = vpop.f32.mrf.mxu0
      %v407 = vadd.f32 %v378, %v406
      %408 = vdwg.mxu0
      %v409 = vmax.f32 %v390, 0.0
      %v410 = vmax.f32 %v392, 0.0
      %v411 = vmax.f32 %v395, 0.0
      %v412 = vmax.f32 %v397, 0.0
      %v413 = vmax.f32 %v400, 0.0
      %v414 = vmax.f32 %v402, 0.0
      %v415 = vmax.f32 %v405, 0.0
      %v416 = vmax.f32 %v407, 0.0
      %v417 = vpack.c.bf16 %v409, %v409
      %v418 = vpack.c.bf16 %v410, %v410
      %v419 = vpack.c.bf16 %v411, %v411
      %v420 = vpack.c.bf16 %v412, %v412
      %v421 = vpack.c.bf16 %v413, %v413
      %v422 = vpack.c.bf16 %v414, %v414
      %v423 = vpack.c.bf16 %v415, %v415
      %v424 = vpack.c.bf16 %v416, %v416
      %425 = vst [vmem:[%s170] sm:$0xf] %v417
      %426 = vst [vmem:[%s170 + $0x4] sm:$0xf] %v418
      %427 = vst [vmem:[%s170 + $0x8] sm:$0xf] %v419
      %428 = vst [vmem:[%s170 + $0xc] sm:$0xf] %v420
      %429 = vst [vmem:[%s170 + $0x10] sm:$0xf] %v421
      %430 = vst [vmem:[%s170 + $0x14] sm:$0xf] %v422
      %431 = vst [vmem:[%s170 + $0x18] sm:$0xf] %v423
      %432 = vst [vmem:[%s170 + $0x1c] sm:$0xf] %v424
      %p433 = scmp.lt.s32.totalorder %s14, 1
      %s434 = scalar_select %p433, %s14, 1
      %s435 = smul.addr %s434, 8
      %s436 = smul.addr %s435, 4
      %s437 = scalar_lea.vmem %s3, %s436
      // Predicated region
      $region33: #{_lambda_.8} parent=31 // pred_check
        %p438 = pneg %p100
      $region34: #{_lambda_.8} parent=31 // pred_check_branch
        %440 = sbr.rel (%p438) target = $region36
      $region35: #{_lambda_.8} parent=31 // pred_region
        _
      $region36: #{_lambda_.8} parent=31 // pred_fallthru
        _
    $region32: #{_lambda_.8} parent=5 // pred_fallthru
      _
    %p441 = scmp.le.s32.totalorder 2, %s9
    // Predicated region
    $region37: #{_lambda_.8} parent=5 // pred_check
      %p442 = pneg %p441
    $region38: #{_lambda_.8} parent=5 // pred_check_branch
      %444 = sbr.rel (%p442) target = $region40
    $region39: #{_lambda_.8} parent=5 // pred_region
      %s445 = ssub.s32 %s9, 2
      // Predicated region
      $region41: #{_lambda_.8} parent=39 // pred_check
        %p446 = pneg %p106
      $region42: #{_lambda_.8} parent=39 // pred_check_branch
        %448 = sbr.rel (%p446) target = $region44
      $region43: #{_lambda_.8} parent=39 // pred_region
        %p449 = scmp.lt.s32.totalorder %s15, 1
        %s450 = scalar_select %p449, %s15, 1
        %s451 = smul.addr %s450, 8
        %s452 = smul.addr %s451, 4
        %s453 = scalar_lea.vmem %s3, %s452
      $region44: #{_lambda_.8} parent=39 // pred_fallthru
        _
    $region40: #{_lambda_.8} parent=5 // pred_fallthru
      _
  $region6: #{_lambda_.8} parent=0 // loop_footer
    %s13 = sadd.s32 1, %s9
  $region7: #{_lambda_.8} parent=0 // loop_footer_branch
    %8 = sbr.rel target = $region3
  $region8: #{_lambda_.8} parent=0 // loop_exit
    _

</llo_original>
